<compile_context>
chip_gen: v7x
topology: tpu7x:2x2x1
jax: 0.10.0
libtpu: 0.0.40
codegen_flags: <defaults>
</compile_context>

<pallas_src>
import functools

import jax
import jax.numpy as jnp
import numpy as np
from jax import lax
from jax.experimental import pallas as pl
from jax.experimental.pallas import tpu as pltpu

EPS = 1e-5


# --------------------------------------------------------------------------
# Kernels
# --------------------------------------------------------------------------
def _conv3x3_banded(pad_ref, m_ref, H, WC):
    """3 matmuls (H, W*C) x (W*C, W*C): dy taps explicit, dx taps folded into M."""
    acc = jnp.zeros((H, WC), jnp.float32)
    for dy in range(3):
        acc = acc + jnp.dot(pad_ref[dy:dy + H, :].astype(jnp.bfloat16),
                            m_ref[dy],
                            preferred_element_type=jnp.float32)
    return acc


def conv1_kernel(x_ref, m_ref, y_ref, s_ref, q_ref, pad_ref):
    """conv1 -> relu; emits per-image sum / sum-of-squares for bn1 (fused stats)."""
    H, WC = x_ref.shape[1], x_ref.shape[2]
    # Height halo only (width halo is folded into the banded weight).
    pad_ref[0:1, :] = jnp.zeros((1, WC), jnp.float32)
    pad_ref[H + 1:H + 2, :] = jnp.zeros((1, WC), jnp.float32)
    pad_ref[1:H + 1, :] = x_ref[0]
    y = jnp.maximum(_conv3x3_banded(pad_ref, m_ref, H, WC), 0.0)   # conv1 -> relu
    y_ref[0] = y
    s_ref[0] = jnp.sum(y, axis=0, keepdims=True)
    q_ref[0] = jnp.sum(y * y, axis=0, keepdims=True)


def conv2_kernel(y_ref, a1_ref, c1_ref, m_ref, z_ref, s_ref, q_ref, pad_ref):
    """bn1 (folded scale/shift) -> conv2; emits bn2 stats (doubles as SE pool)."""
    H, WC = y_ref.shape[1], y_ref.shape[2]
    pad_ref[0:1, :] = jnp.zeros((1, WC), jnp.float32)
    pad_ref[H + 1:H + 2, :] = jnp.zeros((1, WC), jnp.float32)
    pad_ref[1:H + 1, :] = y_ref[0] * a1_ref[...] + c1_ref[...]     # bn1 applied in f32
    z = _conv3x3_banded(pad_ref, m_ref, H, WC)                     # conv2 (no relu)
    z_ref[0] = z
    s_ref[0] = jnp.sum(z, axis=0, keepdims=True)
    q_ref[0] = jnp.sum(z * z, axis=0, keepdims=True)


def se_residual_kernel(z_ref, x_ref, pool_ref, a2t_ref, c2t_ref, a2c_ref, c2c_ref,
                       fc1w_ref, fc1b_ref, fc2wt_ref, fc2bt_ref, out_ref):
    """bn2 -> SE (FCs in-kernel, pool reused from conv2 epilogue) -> +res -> relu."""
    # bn2 is affine, so pool(bn2(z)) = a2 * pool(z) + c2.
    pool_bn = pool_ref[0] * a2c_ref[...] + c2c_ref[...]            # (1, C)
    h = jnp.maximum(
        jnp.dot(pool_bn, fc1w_ref[...], preferred_element_type=jnp.float32)
        + fc1b_ref[...], 0.0)                                      # (1, C//r)
    # fc2 is pre-tiled along W in the wrapper, so the gate comes out already
    # broadcast to the lane-dense (1, W*C) layout -> no in-kernel tile/reshape.
    gate = jax.nn.sigmoid(
        jnp.dot(h, fc2wt_ref[...], preferred_element_type=jnp.float32)
        + fc2bt_ref[...])                                          # (1, W*C)
    bn2 = z_ref[0] * a2t_ref[...] + c2t_ref[...]                   # (H, W*C)
    out_ref[0] = jnp.maximum(bn2 * gate + x_ref[0], 0.0)           # SE * + residual + relu


# --------------------------------------------------------------------------
# Wrapper
# --------------------------------------------------------------------------
def _banded_conv_weight(w_hwio, W):
    """(3,3,Cin,Cout) HWIO -> (3, W*Cin, W*Cout); dx taps + width padding folded in.

    M[dy, wx*Cin+ci, x*Cout+co] = w[dy, wx-x+1, ci, co]  (0 <= wx-x+1 <= 2), else 0.
    """
    Cin, Cout = w_hwio.shape[2], w_hwio.shape[3]
    P = np.zeros((3, W, W), np.float32)                 # P[dx, x, wx] = [wx == x+dx-1]
    for dx in range(3):
        for x in range(W):
            wx = x + dx - 1
            if 0 <= wx < W:
                P[dx, x, wx] = 1.0
    m = jnp.einsum('dxw,ydio->ywixo', jnp.asarray(P), w_hwio)
    return m.reshape(3, W * Cin, W * Cout)


def _scale_shift(sum_v, sumsq_v, n, gamma, beta):
    """Fold batch-norm (training-mode batch stats, biased var) into scale/shift."""
    mean = sum_v / n
    # E[x^2] - m^2 in f32; clamp guards the (tiny) cancellation error.
    var = jnp.maximum(sumsq_v / n - mean * mean, 0.0)
    a = gamma * lax.rsqrt(var + EPS)
    return a, beta - mean * a


@jax.jit
def se_basic_block(x_nchw, params):
    """SEBasicBlock forward (stride=1, identity residual). x_nchw: (B,C,H,W) f32."""
    (w1, g1, b1, w2, g2, b2, fc1w, fc1b, fc2w, fc2b) = params
    x = jnp.transpose(x_nchw, (0, 2, 3, 1)).astype(jnp.float32)     # NHWC
    B, H, W, C = x.shape
    WC = W * C
    n = B * H * W
    x_rows = x.reshape(B, H, WC)                                    # lane-dense rows

    m1 = _banded_conv_weight(w1, W).astype(jnp.bfloat16)            # (3, WC, WC)
    m2 = _banded_conv_weight(w2, W).astype(jnp.bfloat16)

    cparams = pltpu.CompilerParams(dimension_semantics=("parallel",),
                                   vmem_limit_bytes=32 * 1024 * 1024)
    act = jax.ShapeDtypeStruct((B, H, WC), jnp.float32)
    stat = jax.ShapeDtypeStruct((B, 1, WC), jnp.float32)
    act_spec = pl.BlockSpec((1, H, WC), lambda b: (b, 0, 0))
    stat_spec = pl.BlockSpec((1, 1, WC), lambda b: (b, 0, 0))
    m_spec = pl.BlockSpec((3, WC, WC), lambda b: (0, 0, 0))
    vec_spec = pl.BlockSpec((1, WC), lambda b: (0, 0))
    conv_flops = int(B * 3 * 2 * H * WC * WC)
    act_bytes = int(B * H * WC * 4)
    m_bytes = int(3 * WC * WC * 2)

    # ---- kernel A: conv1 -> relu, fused bn1 partial stats -------------------
    y1, s1, q1 = pl.pallas_call(
        conv1_kernel,
        out_shape=(act, stat, stat),
        grid=(B,),
        in_specs=[act_spec, m_spec],
        out_specs=(act_spec, stat_spec, stat_spec),
        scratch_shapes=[pltpu.VMEM((H + 2, WC), jnp.float32)],
        compiler_params=cparams,
        cost_estimate=pl.CostEstimate(flops=conv_flops, transcendentals=0,
                                      bytes_accessed=2 * act_bytes + m_bytes),
    )(x_rows, m1)

    a1, c1 = _scale_shift(s1.reshape(B, W, C).sum((0, 1)),
                          q1.reshape(B, W, C).sum((0, 1)), n, g1, b1)
    a1t, c1t = jnp.tile(a1, W)[None, :], jnp.tile(c1, W)[None, :]   # (1, WC)

    # ---- kernel B: bn1 -> conv2, fused bn2 partial stats + SE pool ----------
    z2, s2, q2 = pl.pallas_call(
        conv2_kernel,
        out_shape=(act, stat, stat),
        grid=(B,),
        in_specs=[act_spec, vec_spec, vec_spec, m_spec],
        out_specs=(act_spec, stat_spec, stat_spec),
        scratch_shapes=[pltpu.VMEM((H + 2, WC), jnp.float32)],
        compiler_params=cparams,
        cost_estimate=pl.CostEstimate(flops=conv_flops, transcendentals=0,
                                      bytes_accessed=2 * act_bytes + m_bytes),
    )(y1, a1t, c1t, m2)

    a2, c2 = _scale_shift(s2.reshape(B, W, C).sum((0, 1)),
                          q2.reshape(B, W, C).sum((0, 1)), n, g2, b2)
    a2t, c2t = jnp.tile(a2, W)[None, :], jnp.tile(c2, W)[None, :]   # (1, WC)
    pool = s2.reshape(B, 1, W, C).sum(axis=2) / (H * W)             # (B, 1, C)
    fc2w_t = jnp.tile(fc2w, (1, W))                                 # (C//r, WC)
    fc2b_t = jnp.tile(fc2b, W)[None, :]                             # (1, WC)
    Cr = fc1w.shape[1]

    # ---- kernel C: bn2 -> SE -> +residual -> relu ---------------------------
    out_rows = pl.pallas_call(
        se_residual_kernel,
        out_shape=act,
        grid=(B,),
        in_specs=[act_spec, act_spec,
                  pl.BlockSpec((1, 1, C), lambda b: (b, 0, 0)),     # pool
                  vec_spec, vec_spec,                               # a2t, c2t
                  pl.BlockSpec((1, C), lambda b: (0, 0)),           # a2 (per-channel)
                  pl.BlockSpec((1, C), lambda b: (0, 0)),           # c2 (per-channel)
                  pl.BlockSpec((C, Cr), lambda b: (0, 0)),          # fc1 W
                  pl.BlockSpec((1, Cr), lambda b: (0, 0)),          # fc1 b
                  pl.BlockSpec((Cr, WC), lambda b: (0, 0)),         # fc2 W (pre-tiled)
                  vec_spec],                                        # fc2 b (pre-tiled)
        out_specs=act_spec,
        compiler_params=cparams,
        cost_estimate=pl.CostEstimate(
            flops=int(B * (2 * C * Cr + 2 * Cr * WC + 5 * H * WC)),
            transcendentals=int(B * WC),
            bytes_accessed=3 * act_bytes),
    )(z2, x_rows, pool, a2t, c2t, a2[None, :], c2[None, :],
      fc1w, fc1b[None, :], fc2w_t, fc2b_t)

    return jnp.transpose(out_rows.reshape(B, H, W, C), (0, 3, 1, 2))  # NCHW


# --------------------------------------------------------------------------
# Pure-JAX reference (mirrors the kernel's MXU precision: bf16 conv inputs,
# f32 accumulation; all BN / SE math in f32).
# --------------------------------------------------------------------------
def reference(x_nchw, params):
    (w1, g1, b1, w2, g2, b2, fc1w, fc1b, fc2w, fc2b) = params
    x = jnp.transpose(x_nchw, (0, 2, 3, 1)).astype(jnp.float32)

    def conv(inp, w):
        return lax.conv_general_dilated(
            inp.astype(jnp.bfloat16), w.astype(jnp.bfloat16), (1, 1), 'SAME',
            dimension_numbers=('NHWC', 'HWIO', 'NHWC'),
            preferred_element_type=jnp.float32)

    def bn(t, g, b):
        m = jnp.mean(t, axis=(0, 1, 2), keepdims=True)
        v = jnp.mean((t - m) ** 2, axis=(0, 1, 2), keepdims=True)
        return (t - m) * lax.rsqrt(v + EPS) * g + b

    out = bn(jax.nn.relu(conv(x, w1)), g1, b1)            # conv1 -> relu -> bn1
    out = bn(conv(out, w2), g2, b2)                       # conv2 -> bn2
    y = jnp.mean(out, axis=(1, 2))                        # SE global avg pool
    h = jax.nn.relu(jnp.dot(y, fc1w, precision=lax.Precision.HIGHEST) + fc1b)
    s = jax.nn.sigmoid(jnp.dot(h, fc2w, precision=lax.Precision.HIGHEST) + fc2b)
    out = out * s[:, None, None, :]
    out = jax.nn.relu(out + x)                            # identity residual
    return jnp.transpose(out, (0, 3, 1, 2))


if __name__ == "__main__":
    B, C, H, W = 2, 16, 8, 8          # inplanes = planes = 16, W*C = 128 lanes
    reduction = 8
    Cr = C // reduction               # 2

    key = jax.random.PRNGKey(0)
    ks = jax.random.split(key, 11)
    params = (
        0.1 * jax.random.normal(ks[0], (3, 3, C, C), jnp.float32),   # conv1 HWIO
        1.0 + 0.1 * jax.random.normal(ks[1], (C,), jnp.float32),     # bn1 gamma
        0.1 * jax.random.normal(ks[2], (C,), jnp.float32),           # bn1 beta
        0.1 * jax.random.normal(ks[3], (3, 3, C, C), jnp.float32),   # conv2 HWIO
        1.0 + 0.1 * jax.random.normal(ks[4], (C,), jnp.float32),     # bn2 gamma
        0.1 * jax.random.normal(ks[5], (C,), jnp.float32),           # bn2 beta
        0.2 * jax.random.normal(ks[6], (C, Cr), jnp.float32),        # SE fc1 W
        0.1 * jax.random.normal(ks[7], (Cr,), jnp.float32),          # SE fc1 b
        0.2 * jax.random.normal(ks[8], (Cr, C), jnp.float32),        # SE fc2 W
        0.1 * jax.random.normal(ks[9], (C,), jnp.float32),           # SE fc2 b
    )
    x = jax.random.normal(ks[10], (B, C, H, W), jnp.float32)         # NCHW input

    out = jax.block_until_ready(se_basic_block(x, params))
    ref = jax.block_until_ready(reference(x, params))
    np.testing.assert_allclose(np.asarray(out), np.asarray(ref),
                               rtol=2e-3, atol=2e-3)
    print("KERNEL_OK")
</pallas_src>

<mosaic_0001>
module attributes {stable_mosaic.version = 11 : i64} {
  func.func @conv1_kernel(%arg0: i32, %arg1: memref<1x8x128xf32, #tpu.memory_space<vmem>>, %arg2: memref<3x128x128xbf16, #tpu.memory_space<vmem>>, %arg3: memref<1x8x128xf32, #tpu.memory_space<vmem>>, %arg4: memref<1x1x128xf32, #tpu.memory_space<vmem>>, %arg5: memref<1x1x128xf32, #tpu.memory_space<vmem>>, %arg6: memref<10x128xf32, #tpu.memory_space<vmem>>) attributes {dimension_semantics = [#tpu.dimension_semantics<parallel>], iteration_bounds = array<i64: 2>, scalar_prefetch = 0 : i64, scratch_operands = 1 : i64, tpu.core_type = #tpu.core_type<tc>, window_params = [{transform_indices = @transform_0, window_bounds = array<i64: 1, 8, 128>}, {pipeline_mode = #tpu.pipeline_mode<synchronous>, transform_indices = @transform_1, window_bounds = array<i64: 3, 128, 128>}, {transform_indices = @transform_2, window_bounds = array<i64: 1, 8, 128>}, {transform_indices = @transform_3, window_bounds = array<i64: 1, 1, 128>}, {transform_indices = @transform_4, window_bounds = array<i64: 1, 1, 128>}]} {
    %cst = arith.constant 0.000000e+00 : f32
    %0 = vector.broadcast %cst : f32 to vector<1x128xf32>
    %c0 = arith.constant 0 : index
    %c0_0 = arith.constant 0 : index
    %1 = vector.load %arg6[%c0, %c0_0] : memref<10x128xf32, #tpu.memory_space<vmem>>, vector<1x128xf32>
    tpu.vector_store %arg6[%c0, %c0_0], %0 {strides = array<i32>} : memref<10x128xf32, #tpu.memory_space<vmem>>, vector<1x128xf32>,
    %cst_1 = arith.constant 0.000000e+00 : f32
    %2 = vector.broadcast %cst_1 : f32 to vector<1x128xf32>
    %c9 = arith.constant 9 : index
    %c0_2 = arith.constant 0 : index
    %3 = vector.load %arg6[%c9, %c0_2] : memref<10x128xf32, #tpu.memory_space<vmem>>, vector<1x128xf32>
    tpu.vector_store %arg6[%c9, %c0_2], %2 {strides = array<i32>} : memref<10x128xf32, #tpu.memory_space<vmem>>, vector<1x128xf32>,
    %c0_3 = arith.constant 0 : index
    %c0_4 = arith.constant 0 : index
    %c0_5 = arith.constant 0 : index
    %4 = vector.load %arg1[%c0_3, %c0_4, %c0_5] : memref<1x8x128xf32, #tpu.memory_space<vmem>>, vector<1x8x128xf32>
    %5 = vector.shape_cast %4 : vector<1x8x128xf32> to vector<8x128xf32>
    %c1 = arith.constant 1 : index
    %c0_6 = arith.constant 0 : index
    %6 = vector.load %arg6[%c1, %c0_6] : memref<10x128xf32, #tpu.memory_space<vmem>>, vector<8x128xf32>
    tpu.vector_store %arg6[%c1, %c0_6], %5 {strides = array<i32>} : memref<10x128xf32, #tpu.memory_space<vmem>>, vector<8x128xf32>,
    %cst_7 = arith.constant 0.000000e+00 : f32
    %7 = vector.broadcast %cst_7 : f32 to vector<8x128xf32>
    %c0_8 = arith.constant 0 : index
    %c0_9 = arith.constant 0 : index
    %8 = vector.load %arg6[%c0_8, %c0_9] : memref<10x128xf32, #tpu.memory_space<vmem>>, vector<8x128xf32>
    %9 = arith.truncf %8 : vector<8x128xf32> to vector<8x128xbf16>
    %c0_10 = arith.constant 0 : index
    %c0_11 = arith.constant 0 : index
    %c0_12 = arith.constant 0 : index
    %10 = vector.load %arg2[%c0_10, %c0_11, %c0_12] : memref<3x128x128xbf16, #tpu.memory_space<vmem>>, vector<1x128x128xbf16>
    %11 = vector.shape_cast %10 : vector<1x128x128xbf16> to vector<128x128xbf16>
    %cst_13 = arith.constant dense<0.000000e+00> : vector<8x128xf32>
    %12 = tpu.matmul %9, %11, %cst_13 {dimension_numbers = #tpu.dot_dimension_numbers<[1], [0], [0], [1], [0, 0, 1, 1], [], []>} : vector<8x128xbf16>, vector<128x128xbf16>, vector<8x128xf32> -> vector<8x128xf32>
    %13 = arith.addf %7, %12 : vector<8x128xf32>
    %c1_14 = arith.constant 1 : index
    %c0_15 = arith.constant 0 : index
    %14 = vector.load %arg6[%c1_14, %c0_15] : memref<10x128xf32, #tpu.memory_space<vmem>>, vector<8x128xf32>
    %15 = arith.truncf %14 : vector<8x128xf32> to vector<8x128xbf16>
    %c1_16 = arith.constant 1 : index
    %c0_17 = arith.constant 0 : index
    %c0_18 = arith.constant 0 : index
    %16 = vector.load %arg2[%c1_16, %c0_17, %c0_18] : memref<3x128x128xbf16, #tpu.memory_space<vmem>>, vector<1x128x128xbf16>
    %17 = vector.shape_cast %16 : vector<1x128x128xbf16> to vector<128x128xbf16>
    %cst_19 = arith.constant dense<0.000000e+00> : vector<8x128xf32>
    %18 = tpu.matmul %15, %17, %cst_19 {dimension_numbers = #tpu.dot_dimension_numbers<[1], [0], [0], [1], [0, 0, 1, 1], [], []>} : vector<8x128xbf16>, vector<128x128xbf16>, vector<8x128xf32> -> vector<8x128xf32>
    %19 = arith.addf %13, %18 : vector<8x128xf32>
    %c2 = arith.constant 2 : index
    %c0_20 = arith.constant 0 : index
    %20 = vector.load %arg6[%c2, %c0_20] : memref<10x128xf32, #tpu.memory_space<vmem>>, vector<8x128xf32>
    %21 = arith.truncf %20 : vector<8x128xf32> to vector<8x128xbf16>
    %c2_21 = arith.constant 2 : index
    %c0_22 = arith.constant 0 : index
    %c0_23 = arith.constant 0 : index
    %22 = vector.load %arg2[%c2_21, %c0_22, %c0_23] : memref<3x128x128xbf16, #tpu.memory_space<vmem>>, vector<1x128x128xbf16>
    %23 = vector.shape_cast %22 : vector<1x128x128xbf16> to vector<128x128xbf16>
    %cst_24 = arith.constant dense<0.000000e+00> : vector<8x128xf32>
    %24 = tpu.matmul %21, %23, %cst_24 {dimension_numbers = #tpu.dot_dimension_numbers<[1], [0], [0], [1], [0, 0, 1, 1], [], []>} : vector<8x128xbf16>, vector<128x128xbf16>, vector<8x128xf32> -> vector<8x128xf32>
    %25 = arith.addf %19, %24 : vector<8x128xf32>
    %cst_25 = arith.constant 0.000000e+00 : f32
    %26 = vector.broadcast %cst_25 : f32 to vector<8x128xf32>
    %27 = arith.maximumf %25, %26 : vector<8x128xf32>
    %c0_26 = arith.constant 0 : index
    %c0_27 = arith.constant 0 : index
    %c0_28 = arith.constant 0 : index
    %28 = vector.load %arg3[%c0_26, %c0_27, %c0_28] : memref<1x8x128xf32, #tpu.memory_space<vmem>>, vector<1x8x128xf32>
    %29 = vector.shape_cast %28 : vector<1x8x128xf32> to vector<8x128xf32>
    %30 = vector.shape_cast %27 : vector<8x128xf32> to vector<1x8x128xf32>
    tpu.vector_store %arg3[%c0_26, %c0_27, %c0_28], %30 {strides = array<i32>} : memref<1x8x128xf32, #tpu.memory_space<vmem>>, vector<1x8x128xf32>,
    %cst_29 = arith.constant dense<0.000000e+00> : vector<128xf32>
    %31 = vector.multi_reduction <add>, %27, %cst_29 [0] : vector<8x128xf32> to vector<128xf32>
    %32 = vector.shape_cast %31 : vector<128xf32> to vector<1x128xf32>
    %c0_30 = arith.constant 0 : index
    %c0_31 = arith.constant 0 : index
    %c0_32 = arith.constant 0 : index
    %33 = vector.load %arg4[%c0_30, %c0_31, %c0_32] : memref<1x1x128xf32, #tpu.memory_space<vmem>>, vector<1x1x128xf32>
    %34 = vector.shape_cast %33 : vector<1x1x128xf32> to vector<1x128xf32>
    %35 = vector.shape_cast %32 : vector<1x128xf32> to vector<1x1x128xf32>
    tpu.vector_store %arg4[%c0_30, %c0_31, %c0_32], %35 {strides = array<i32>} : memref<1x1x128xf32, #tpu.memory_space<vmem>>, vector<1x1x128xf32>,
    %36 = arith.mulf %27, %27 : vector<8x128xf32>
    %cst_33 = arith.constant dense<0.000000e+00> : vector<128xf32>
    %37 = vector.multi_reduction <add>, %36, %cst_33 [0] : vector<8x128xf32> to vector<128xf32>
    %38 = vector.shape_cast %37 : vector<128xf32> to vector<1x128xf32>
    %c0_34 = arith.constant 0 : index
    %c0_35 = arith.constant 0 : index
    %c0_36 = arith.constant 0 : index
    %39 = vector.load %arg5[%c0_34, %c0_35, %c0_36] : memref<1x1x128xf32, #tpu.memory_space<vmem>>, vector<1x1x128xf32>
    %40 = vector.shape_cast %39 : vector<1x1x128xf32> to vector<1x128xf32>
    %41 = vector.shape_cast %38 : vector<1x128xf32> to vector<1x1x128xf32>
    tpu.vector_store %arg5[%c0_34, %c0_35, %c0_36], %41 {strides = array<i32>} : memref<1x1x128xf32, #tpu.memory_space<vmem>>, vector<1x1x128xf32>,
    return
  }
  func.func @transform_0(%arg0: i32) -> (i32, i32, i32) {
    %c0_i32 = arith.constant 0 : i32
    %c0_i32_0 = arith.constant 0 : i32
    %c0_i32_1 = arith.constant 0 : i32
    return %arg0, %c0_i32, %c0_i32_0 : i32, i32, i32
  }
  func.func @transform_1(%arg0: i32) -> (i32, i32, i32) {
    %c0_i32 = arith.constant 0 : i32
    %c0_i32_0 = arith.constant 0 : i32
    %c0_i32_1 = arith.constant 0 : i32
    %c0_i32_2 = arith.constant 0 : i32
    return %c0_i32, %c0_i32_0, %c0_i32_1 : i32, i32, i32
  }
  func.func @transform_2(%arg0: i32) -> (i32, i32, i32) {
    %c0_i32 = arith.constant 0 : i32
    %c0_i32_0 = arith.constant 0 : i32
    %c0_i32_1 = arith.constant 0 : i32
    return %arg0, %c0_i32, %c0_i32_0 : i32, i32, i32
  }
  func.func @transform_3(%arg0: i32) -> (i32, i32, i32) {
    %c0_i32 = arith.constant 0 : i32
    %c0_i32_0 = arith.constant 0 : i32
    %c0_i32_1 = arith.constant 0 : i32
    return %arg0, %c0_i32, %c0_i32_0 : i32, i32, i32
  }
  func.func @transform_4(%arg0: i32) -> (i32, i32, i32) {
    %c0_i32 = arith.constant 0 : i32
    %c0_i32_0 = arith.constant 0 : i32
    %c0_i32_1 = arith.constant 0 : i32
    return %arg0, %c0_i32, %c0_i32_0 : i32, i32, i32
  }
}

module attributes {stable_mosaic.version = 11 : i64} {
  func.func @conv2_kernel(%arg0: i32, %arg1: memref<1x8x128xf32, #tpu.memory_space<vmem>>, %arg2: memref<1x128xf32, #tpu.memory_space<vmem>>, %arg3: memref<1x128xf32, #tpu.memory_space<vmem>>, %arg4: memref<3x128x128xbf16, #tpu.memory_space<vmem>>, %arg5: memref<1x8x128xf32, #tpu.memory_space<vmem>>, %arg6: memref<1x1x128xf32, #tpu.memory_space<vmem>>, %arg7: memref<1x1x128xf32, #tpu.memory_space<vmem>>, %arg8: memref<10x128xf32, #tpu.memory_space<vmem>>) attributes {dimension_semantics = [#tpu.dimension_semantics<parallel>], iteration_bounds = array<i64: 2>, scalar_prefetch = 0 : i64, scratch_operands = 1 : i64, tpu.core_type = #tpu.core_type<tc>, window_params = [{transform_indices = @transform_0, window_bounds = array<i64: 1, 8, 128>}, {pipeline_mode = #tpu.pipeline_mode<synchronous>, transform_indices = @transform_1, window_bounds = array<i64: 1, 128>}, {pipeline_mode = #tpu.pipeline_mode<synchronous>, transform_indices = @transform_2, window_bounds = array<i64: 1, 128>}, {pipeline_mode = #tpu.pipeline_mode<synchronous>, transform_indices = @transform_3, window_bounds = array<i64: 3, 128, 128>}, {transform_indices = @transform_4, window_bounds = array<i64: 1, 8, 128>}, {transform_indices = @transform_5, window_bounds = array<i64: 1, 1, 128>}, {transform_indices = @transform_6, window_bounds = array<i64: 1, 1, 128>}]} {
    %cst = arith.constant 0.000000e+00 : f32
    %0 = vector.broadcast %cst : f32 to vector<1x128xf32>
    %c0 = arith.constant 0 : index
    %c0_0 = arith.constant 0 : index
    %1 = vector.load %arg8[%c0, %c0_0] : memref<10x128xf32, #tpu.memory_space<vmem>>, vector<1x128xf32>
    tpu.vector_store %arg8[%c0, %c0_0], %0 {strides = array<i32>} : memref<10x128xf32, #tpu.memory_space<vmem>>, vector<1x128xf32>,
    %cst_1 = arith.constant 0.000000e+00 : f32
    %2 = vector.broadcast %cst_1 : f32 to vector<1x128xf32>
    %c9 = arith.constant 9 : index
    %c0_2 = arith.constant 0 : index
    %3 = vector.load %arg8[%c9, %c0_2] : memref<10x128xf32, #tpu.memory_space<vmem>>, vector<1x128xf32>
    tpu.vector_store %arg8[%c9, %c0_2], %2 {strides = array<i32>} : memref<10x128xf32, #tpu.memory_space<vmem>>, vector<1x128xf32>,
    %c0_3 = arith.constant 0 : index
    %c0_4 = arith.constant 0 : index
    %c0_5 = arith.constant 0 : index
    %4 = vector.load %arg1[%c0_3, %c0_4, %c0_5] : memref<1x8x128xf32, #tpu.memory_space<vmem>>, vector<1x8x128xf32>
    %5 = vector.shape_cast %4 : vector<1x8x128xf32> to vector<8x128xf32>
    %c0_6 = arith.constant 0 : index
    %c0_7 = arith.constant 0 : index
    %6 = vector.load %arg2[%c0_6, %c0_7] : memref<1x128xf32, #tpu.memory_space<vmem>>, vector<1x128xf32>
    %7 = vector.broadcast %6 : vector<1x128xf32> to vector<8x128xf32>
    %8 = arith.mulf %5, %7 : vector<8x128xf32>
    %c0_8 = arith.constant 0 : index
    %c0_9 = arith.constant 0 : index
    %9 = vector.load %arg3[%c0_8, %c0_9] : memref<1x128xf32, #tpu.memory_space<vmem>>, vector<1x128xf32>
    %10 = vector.broadcast %9 : vector<1x128xf32> to vector<8x128xf32>
    %11 = arith.addf %8, %10 : vector<8x128xf32>
    %c1 = arith.constant 1 : index
    %c0_10 = arith.constant 0 : index
    %12 = vector.load %arg8[%c1, %c0_10] : memref<10x128xf32, #tpu.memory_space<vmem>>, vector<8x128xf32>
    tpu.vector_store %arg8[%c1, %c0_10], %11 {strides = array<i32>} : memref<10x128xf32, #tpu.memory_space<vmem>>, vector<8x128xf32>,
    %cst_11 = arith.constant 0.000000e+00 : f32
    %13 = vector.broadcast %cst_11 : f32 to vector<8x128xf32>
    %c0_12 = arith.constant 0 : index
    %c0_13 = arith.constant 0 : index
    %14 = vector.load %arg8[%c0_12, %c0_13] : memref<10x128xf32, #tpu.memory_space<vmem>>, vector<8x128xf32>
    %15 = arith.truncf %14 : vector<8x128xf32> to vector<8x128xbf16>
    %c0_14 = arith.constant 0 : index
    %c0_15 = arith.constant 0 : index
    %c0_16 = arith.constant 0 : index
    %16 = vector.load %arg4[%c0_14, %c0_15, %c0_16] : memref<3x128x128xbf16, #tpu.memory_space<vmem>>, vector<1x128x128xbf16>
    %17 = vector.shape_cast %16 : vector<1x128x128xbf16> to vector<128x128xbf16>
    %cst_17 = arith.constant dense<0.000000e+00> : vector<8x128xf32>
    %18 = tpu.matmul %15, %17, %cst_17 {dimension_numbers = #tpu.dot_dimension_numbers<[1], [0], [0], [1], [0, 0, 1, 1], [], []>} : vector<8x128xbf16>, vector<128x128xbf16>, vector<8x128xf32> -> vector<8x128xf32>
    %19 = arith.addf %13, %18 : vector<8x128xf32>
    %c1_18 = arith.constant 1 : index
    %c0_19 = arith.constant 0 : index
    %20 = vector.load %arg8[%c1_18, %c0_19] : memref<10x128xf32, #tpu.memory_space<vmem>>, vector<8x128xf32>
    %21 = arith.truncf %20 : vector<8x128xf32> to vector<8x128xbf16>
    %c1_20 = arith.constant 1 : index
    %c0_21 = arith.constant 0 : index
    %c0_22 = arith.constant 0 : index
    %22 = vector.load %arg4[%c1_20, %c0_21, %c0_22] : memref<3x128x128xbf16, #tpu.memory_space<vmem>>, vector<1x128x128xbf16>
    %23 = vector.shape_cast %22 : vector<1x128x128xbf16> to vector<128x128xbf16>
    %cst_23 = arith.constant dense<0.000000e+00> : vector<8x128xf32>
    %24 = tpu.matmul %21, %23, %cst_23 {dimension_numbers = #tpu.dot_dimension_numbers<[1], [0], [0], [1], [0, 0, 1, 1], [], []>} : vector<8x128xbf16>, vector<128x128xbf16>, vector<8x128xf32> -> vector<8x128xf32>
    %25 = arith.addf %19, %24 : vector<8x128xf32>
    %c2 = arith.constant 2 : index
    %c0_24 = arith.constant 0 : index
    %26 = vector.load %arg8[%c2, %c0_24] : memref<10x128xf32, #tpu.memory_space<vmem>>, vector<8x128xf32>
    %27 = arith.truncf %26 : vector<8x128xf32> to vector<8x128xbf16>
    %c2_25 = arith.constant 2 : index
    %c0_26 = arith.constant 0 : index
    %c0_27 = arith.constant 0 : index
    %28 = vector.load %arg4[%c2_25, %c0_26, %c0_27] : memref<3x128x128xbf16, #tpu.memory_space<vmem>>, vector<1x128x128xbf16>
    %29 = vector.shape_cast %28 : vector<1x128x128xbf16> to vector<128x128xbf16>
    %cst_28 = arith.constant dense<0.000000e+00> : vector<8x128xf32>
    %30 = tpu.matmul %27, %29, %cst_28 {dimension_numbers = #tpu.dot_dimension_numbers<[1], [0], [0], [1], [0, 0, 1, 1], [], []>} : vector<8x128xbf16>, vector<128x128xbf16>, vector<8x128xf32> -> vector<8x128xf32>
    %31 = arith.addf %25, %30 : vector<8x128xf32>
    %c0_29 = arith.constant 0 : index
    %c0_30 = arith.constant 0 : index
    %c0_31 = arith.constant 0 : index
    %32 = vector.load %arg5[%c0_29, %c0_30, %c0_31] : memref<1x8x128xf32, #tpu.memory_space<vmem>>, vector<1x8x128xf32>
    %33 = vector.shape_cast %32 : vector<1x8x128xf32> to vector<8x128xf32>
    %34 = vector.shape_cast %31 : vector<8x128xf32> to vector<1x8x128xf32>
    tpu.vector_store %arg5[%c0_29, %c0_30, %c0_31], %34 {strides = array<i32>} : memref<1x8x128xf32, #tpu.memory_space<vmem>>, vector<1x8x128xf32>,
    %cst_32 = arith.constant dense<0.000000e+00> : vector<128xf32>
    %35 = vector.multi_reduction <add>, %31, %cst_32 [0] : vector<8x128xf32> to vector<128xf32>
    %36 = vector.shape_cast %35 : vector<128xf32> to vector<1x128xf32>
    %c0_33 = arith.constant 0 : index
    %c0_34 = arith.constant 0 : index
    %c0_35 = arith.constant 0 : index
    %37 = vector.load %arg6[%c0_33, %c0_34, %c0_35] : memref<1x1x128xf32, #tpu.memory_space<vmem>>, vector<1x1x128xf32>
    %38 = vector.shape_cast %37 : vector<1x1x128xf32> to vector<1x128xf32>
    %39 = vector.shape_cast %36 : vector<1x128xf32> to vector<1x1x128xf32>
    tpu.vector_store %arg6[%c0_33, %c0_34, %c0_35], %39 {strides = array<i32>} : memref<1x1x128xf32, #tpu.memory_space<vmem>>, vector<1x1x128xf32>,
    %40 = arith.mulf %31, %31 : vector<8x128xf32>
    %cst_36 = arith.constant dense<0.000000e+00> : vector<128xf32>
    %41 = vector.multi_reduction <add>, %40, %cst_36 [0] : vector<8x128xf32> to vector<128xf32>
    %42 = vector.shape_cast %41 : vector<128xf32> to vector<1x128xf32>
    %c0_37 = arith.constant 0 : index
    %c0_38 = arith.constant 0 : index
    %c0_39 = arith.constant 0 : index
    %43 = vector.load %arg7[%c0_37, %c0_38, %c0_39] : memref<1x1x128xf32, #tpu.memory_space<vmem>>, vector<1x1x128xf32>
    %44 = vector.shape_cast %43 : vector<1x1x128xf32> to vector<1x128xf32>
    %45 = vector.shape_cast %42 : vector<1x128xf32> to vector<1x1x128xf32>
    tpu.vector_store %arg7[%c0_37, %c0_38, %c0_39], %45 {strides = array<i32>} : memref<1x1x128xf32, #tpu.memory_space<vmem>>, vector<1x1x128xf32>,
    return
  }
  func.func @transform_0(%arg0: i32) -> (i32, i32, i32) {
    %c0_i32 = arith.constant 0 : i32
    %c0_i32_0 = arith.constant 0 : i32
    %c0_i32_1 = arith.constant 0 : i32
    return %arg0, %c0_i32, %c0_i32_0 : i32, i32, i32
  }
  func.func @transform_1(%arg0: i32) -> (i32, i32) {
    %c0_i32 = arith.constant 0 : i32
    %c0_i32_0 = arith.constant 0 : i32
    %c0_i32_1 = arith.constant 0 : i32
    return %c0_i32, %c0_i32_0 : i32, i32
  }
  func.func @transform_2(%arg0: i32) -> (i32, i32) {
    %c0_i32 = arith.constant 0 : i32
    %c0_i32_0 = arith.constant 0 : i32
    %c0_i32_1 = arith.constant 0 : i32
    return %c0_i32, %c0_i32_0 : i32, i32
  }
  func.func @transform_3(%arg0: i32) -> (i32, i32, i32) {
    %c0_i32 = arith.constant 0 : i32
    %c0_i32_0 = arith.constant 0 : i32
    %c0_i32_1 = arith.constant 0 : i32
    %c0_i32_2 = arith.constant 0 : i32
    return %c0_i32, %c0_i32_0, %c0_i32_1 : i32, i32, i32
  }
  func.func @transform_4(%arg0: i32) -> (i32, i32, i32) {
    %c0_i32 = arith.constant 0 : i32
    %c0_i32_0 = arith.constant 0 : i32
    %c0_i32_1 = arith.constant 0 : i32
    return %arg0, %c0_i32, %c0_i32_0 : i32, i32, i32
  }
  func.func @transform_5(%arg0: i32) -> (i32, i32, i32) {
    %c0_i32 = arith.constant 0 : i32
    %c0_i32_0 = arith.constant 0 : i32
    %c0_i32_1 = arith.constant 0 : i32
    return %arg0, %c0_i32, %c0_i32_0 : i32, i32, i32
  }
  func.func @transform_6(%arg0: i32) -> (i32, i32, i32) {
    %c0_i32 = arith.constant 0 : i32
    %c0_i32_0 = arith.constant 0 : i32
    %c0_i32_1 = arith.constant 0 : i32
    return %arg0, %c0_i32, %c0_i32_0 : i32, i32, i32
  }
}

module attributes {stable_mosaic.version = 11 : i64} {
  func.func @se_residual_kernel(%arg0: i32, %arg1: memref<1x8x128xf32, #tpu.memory_space<vmem>>, %arg2: memref<1x8x128xf32, #tpu.memory_space<vmem>>, %arg3: memref<1x1x16xf32, #tpu.memory_space<vmem>>, %arg4: memref<1x128xf32, #tpu.memory_space<vmem>>, %arg5: memref<1x128xf32, #tpu.memory_space<vmem>>, %arg6: memref<1x16xf32, #tpu.memory_space<vmem>>, %arg7: memref<1x16xf32, #tpu.memory_space<vmem>>, %arg8: memref<16x2xf32, #tpu.memory_space<vmem>>, %arg9: memref<1x2xf32, #tpu.memory_space<vmem>>, %arg10: memref<2x128xf32, #tpu.memory_space<vmem>>, %arg11: memref<1x128xf32, #tpu.memory_space<vmem>>, %arg12: memref<1x8x128xf32, #tpu.memory_space<vmem>>) attributes {dimension_semantics = [#tpu.dimension_semantics<parallel>], iteration_bounds = array<i64: 2>, scalar_prefetch = 0 : i64, scratch_operands = 0 : i64, tpu.core_type = #tpu.core_type<tc>, window_params = [{transform_indices = @transform_0, window_bounds = array<i64: 1, 8, 128>}, {transform_indices = @transform_1, window_bounds = array<i64: 1, 8, 128>}, {transform_indices = @transform_2, window_bounds = array<i64: 1, 1, 16>}, {pipeline_mode = #tpu.pipeline_mode<synchronous>, transform_indices = @transform_3, window_bounds = array<i64: 1, 128>}, {pipeline_mode = #tpu.pipeline_mode<synchronous>, transform_indices = @transform_4, window_bounds = array<i64: 1, 128>}, {pipeline_mode = #tpu.pipeline_mode<synchronous>, transform_indices = @transform_5, window_bounds = array<i64: 1, 16>}, {pipeline_mode = #tpu.pipeline_mode<synchronous>, transform_indices = @transform_6, window_bounds = array<i64: 1, 16>}, {pipeline_mode = #tpu.pipeline_mode<synchronous>, transform_indices = @transform_7, window_bounds = array<i64: 16, 2>}, {pipeline_mode = #tpu.pipeline_mode<synchronous>, transform_indices = @transform_8, window_bounds = array<i64: 1, 2>}, {pipeline_mode = #tpu.pipeline_mode<synchronous>, transform_indices = @transform_9, window_bounds = array<i64: 2, 128>}, {pipeline_mode = #tpu.pipeline_mode<synchronous>, transform_indices = @transform_10, window_bounds = array<i64: 1, 128>}, {transform_indices = @transform_11, window_bounds = array<i64: 1, 8, 128>}]} {
    %c0 = arith.constant 0 : index
    %c0_0 = arith.constant 0 : index
    %c0_1 = arith.constant 0 : index
    %0 = vector.load %arg3[%c0, %c0_0, %c0_1] : memref<1x1x16xf32, #tpu.memory_space<vmem>>, vector<1x1x16xf32>
    %1 = vector.shape_cast %0 : vector<1x1x16xf32> to vector<1x16xf32>
    %c0_2 = arith.constant 0 : index
    %c0_3 = arith.constant 0 : index
    %2 = vector.load %arg6[%c0_2, %c0_3] : memref<1x16xf32, #tpu.memory_space<vmem>>, vector<1x16xf32>
    %3 = arith.mulf %1, %2 : vector<1x16xf32>
    %c0_4 = arith.constant 0 : index
    %c0_5 = arith.constant 0 : index
    %4 = vector.load %arg7[%c0_4, %c0_5] : memref<1x16xf32, #tpu.memory_space<vmem>>, vector<1x16xf32>
    %5 = arith.addf %3, %4 : vector<1x16xf32>
    %c0_6 = arith.constant 0 : index
    %c0_7 = arith.constant 0 : index
    %6 = vector.load %arg8[%c0_6, %c0_7] : memref<16x2xf32, #tpu.memory_space<vmem>>, vector<16x2xf32>
    %cst = arith.constant dense<0.000000e+00> : vector<1x2xf32>
    %7 = tpu.matmul %5, %6, %cst {dimension_numbers = #tpu.dot_dimension_numbers<[1], [0], [0], [1], [0, 0, 1, 1], [], []>} : vector<1x16xf32>, vector<16x2xf32>, vector<1x2xf32> -> vector<1x2xf32>
    %c0_8 = arith.constant 0 : index
    %c0_9 = arith.constant 0 : index
    %8 = vector.load %arg9[%c0_8, %c0_9] : memref<1x2xf32, #tpu.memory_space<vmem>>, vector<1x2xf32>
    %9 = arith.addf %7, %8 : vector<1x2xf32>
    %cst_10 = arith.constant 0.000000e+00 : f32
    %10 = vector.broadcast %cst_10 : f32 to vector<1x2xf32>
    %11 = arith.maximumf %9, %10 : vector<1x2xf32>
    %c0_11 = arith.constant 0 : index
    %c0_12 = arith.constant 0 : index
    %12 = vector.load %arg10[%c0_11, %c0_12] : memref<2x128xf32, #tpu.memory_space<vmem>>, vector<2x128xf32>
    %cst_13 = arith.constant dense<0.000000e+00> : vector<1x128xf32>
    %13 = tpu.matmul %11, %12, %cst_13 {dimension_numbers = #tpu.dot_dimension_numbers<[1], [0], [0], [1], [0, 0, 1, 1], [], []>} : vector<1x2xf32>, vector<2x128xf32>, vector<1x128xf32> -> vector<1x128xf32>
    %c0_14 = arith.constant 0 : index
    %c0_15 = arith.constant 0 : index
    %14 = vector.load %arg11[%c0_14, %c0_15] : memref<1x128xf32, #tpu.memory_space<vmem>>, vector<1x128xf32>
    %15 = arith.addf %13, %14 : vector<1x128xf32>
    %16 = arith.negf %15 : vector<1x128xf32>
    %17 = math.exp %16 : vector<1x128xf32>
    %cst_16 = arith.constant 1.000000e+00 : f32
    %18 = vector.broadcast %cst_16 : f32 to vector<1x128xf32>
    %19 = arith.addf %18, %17 : vector<1x128xf32>
    %20 = arith.divf %18, %19 : vector<1x128xf32>
    %c0_17 = arith.constant 0 : index
    %c0_18 = arith.constant 0 : index
    %c0_19 = arith.constant 0 : index
    %21 = vector.load %arg1[%c0_17, %c0_18, %c0_19] : memref<1x8x128xf32, #tpu.memory_space<vmem>>, vector<1x8x128xf32>
    %22 = vector.shape_cast %21 : vector<1x8x128xf32> to vector<8x128xf32>
    %c0_20 = arith.constant 0 : index
    %c0_21 = arith.constant 0 : index
    %23 = vector.load %arg4[%c0_20, %c0_21] : memref<1x128xf32, #tpu.memory_space<vmem>>, vector<1x128xf32>
    %24 = vector.broadcast %23 : vector<1x128xf32> to vector<8x128xf32>
    %25 = arith.mulf %22, %24 : vector<8x128xf32>
    %c0_22 = arith.constant 0 : index
    %c0_23 = arith.constant 0 : index
    %26 = vector.load %arg5[%c0_22, %c0_23] : memref<1x128xf32, #tpu.memory_space<vmem>>, vector<1x128xf32>
    %27 = vector.broadcast %26 : vector<1x128xf32> to vector<8x128xf32>
    %28 = arith.addf %25, %27 : vector<8x128xf32>
    %29 = vector.broadcast %20 : vector<1x128xf32> to vector<8x128xf32>
    %30 = arith.mulf %28, %29 : vector<8x128xf32>
    %c0_24 = arith.constant 0 : index
    %c0_25 = arith.constant 0 : index
    %c0_26 = arith.constant 0 : index
    %31 = vector.load %arg2[%c0_24, %c0_25, %c0_26] : memref<1x8x128xf32, #tpu.memory_space<vmem>>, vector<1x8x128xf32>
    %32 = vector.shape_cast %31 : vector<1x8x128xf32> to vector<8x128xf32>
    %33 = arith.addf %30, %32 : vector<8x128xf32>
    %cst_27 = arith.constant 0.000000e+00 : f32
    %34 = vector.broadcast %cst_27 : f32 to vector<8x128xf32>
    %35 = arith.maximumf %33, %34 : vector<8x128xf32>
    %c0_28 = arith.constant 0 : index
    %c0_29 = arith.constant 0 : index
    %c0_30 = arith.constant 0 : index
    %36 = vector.load %arg12[%c0_28, %c0_29, %c0_30] : memref<1x8x128xf32, #tpu.memory_space<vmem>>, vector<1x8x128xf32>
    %37 = vector.shape_cast %36 : vector<1x8x128xf32> to vector<8x128xf32>
    %38 = vector.shape_cast %35 : vector<8x128xf32> to vector<1x8x128xf32>
    tpu.vector_store %arg12[%c0_28, %c0_29, %c0_30], %38 {strides = array<i32>} : memref<1x8x128xf32, #tpu.memory_space<vmem>>, vector<1x8x128xf32>,
    return
  }
  func.func @transform_0(%arg0: i32) -> (i32, i32, i32) {
    %c0_i32 = arith.constant 0 : i32
    %c0_i32_0 = arith.constant 0 : i32
    %c0_i32_1 = arith.constant 0 : i32
    return %arg0, %c0_i32, %c0_i32_0 : i32, i32, i32
  }
  func.func @transform_1(%arg0: i32) -> (i32, i32, i32) {
    %c0_i32 = arith.constant 0 : i32
    %c0_i32_0 = arith.constant 0 : i32
    %c0_i32_1 = arith.constant 0 : i32
    return %arg0, %c0_i32, %c0_i32_0 : i32, i32, i32
  }
  func.func @transform_2(%arg0: i32) -> (i32, i32, i32) {
    %c0_i32 = arith.constant 0 : i32
    %c0_i32_0 = arith.constant 0 : i32
    %c0_i32_1 = arith.constant 0 : i32
    return %arg0, %c0_i32, %c0_i32_0 : i32, i32, i32
  }
  func.func @transform_3(%arg0: i32) -> (i32, i32) {
    %c0_i32 = arith.constant 0 : i32
    %c0_i32_0 = arith.constant 0 : i32
    %c0_i32_1 = arith.constant 0 : i32
    return %c0_i32, %c0_i32_0 : i32, i32
  }
  func.func @transform_4(%arg0: i32) -> (i32, i32) {
    %c0_i32 = arith.constant 0 : i32
    %c0_i32_0 = arith.constant 0 : i32
    %c0_i32_1 = arith.constant 0 : i32
    return %c0_i32, %c0_i32_0 : i32, i32
  }
  func.func @transform_5(%arg0: i32) -> (i32, i32) {
    %c0_i32 = arith.constant 0 : i32
    %c0_i32_0 = arith.constant 0 : i32
    %c0_i32_1 = arith.constant 0 : i32
    return %c0_i32, %c0_i32_0 : i32, i32
  }
  func.func @transform_6(%arg0: i32) -> (i32, i32) {
    %c0_i32 = arith.constant 0 : i32
    %c0_i32_0 = arith.constant 0 : i32
    %c0_i32_1 = arith.constant 0 : i32
    return %c0_i32, %c0_i32_0 : i32, i32
  }
  func.func @transform_7(%arg0: i32) -> (i32, i32) {
    %c0_i32 = arith.constant 0 : i32
    %c0_i32_0 = arith.constant 0 : i32
    %c0_i32_1 = arith.constant 0 : i32
    return %c0_i32, %c0_i32_0 : i32, i32
  }
  func.func @transform_8(%arg0: i32) -> (i32, i32) {
    %c0_i32 = arith.constant 0 : i32
    %c0_i32_0 = arith.constant 0 : i32
    %c0_i32_1 = arith.constant 0 : i32
    return %c0_i32, %c0_i32_0 : i32, i32
  }
  func.func @transform_9(%arg0: i32) -> (i32, i32) {
    %c0_i32 = arith.constant 0 : i32
    %c0_i32_0 = arith.constant 0 : i32
    %c0_i32_1 = arith.constant 0 : i32
    return %c0_i32, %c0_i32_0 : i32, i32
  }
  func.func @transform_10(%arg0: i32) -> (i32, i32) {
    %c0_i32 = arith.constant 0 : i32
    %c0_i32_0 = arith.constant 0 : i32
    %c0_i32_1 = arith.constant 0 : i32
    return %c0_i32, %c0_i32_0 : i32, i32
  }
  func.func @transform_11(%arg0: i32) -> (i32, i32, i32) {
    %c0_i32 = arith.constant 0 : i32
    %c0_i32_0 = arith.constant 0 : i32
    %c0_i32_1 = arith.constant 0 : i32
    return %arg0, %c0_i32, %c0_i32_0 : i32, i32, i32
  }
}

</mosaic_0001>

<llo_original>
// kernel: se_basic_block.3
$region0: #{se_basic_block.3}
  #allocation0 [shape = 'u32[]', space=smem, size = 0x4, offset = 0x4, fixed_abs, tag = 'smem constant byte address 0x4 - core index']
  #allocation1 [shape = 'u32[144,128]{1,0:T(1,128)}', space=vmem, size = 0x12000, scoped, tag = 'internal scratch']
  #allocation2 [shape = 'f32[10,128]{1,0:T(8,128)}', space=vmem, size = 0x2000, scoped, tag = 'scratch operand']
  %s0 = inlined_call_operand.vmem [shape: f32[2,8,128], index: 0, kind: input, shape index: {}]
  %s1 = inlined_call_operand.vmem [shape: bf16[3,128,128], index: 1, kind: input, shape index: {}]
  %s2 = inlined_call_operand.vmem [shape: f32[2,8,128], index: 2, kind: output, shape index: {0}]
  %s3 = inlined_call_operand.vmem [shape: f32[2,1,128], index: 3, kind: output, shape index: {1}]
  %s4 = inlined_call_operand.vmem [shape: f32[2,1,128], index: 4, kind: output, shape index: {2}]
  %5 = xla_tuple %s2, %s3, %s4
  %s6 = sld [smem:[#allocation0]]
  $region57: #{se_basic_block.3} parent=0
    _
  %s8 = ssub.s32 1, %s6
  %s9 = scalar_select 0, %s8, %s6
  loop: start=0, step=1, limit=4
  $region2: #{se_basic_block.3} parent=0 // loop_pre_header
    _
  $region3: #{se_basic_block.3} parent=0 // loop_header
    %s11 = sphi 0, %s15
    %p12 = scmp.ge.s32.totalorder %s11, 4
    %s21 = sphi 0, %s23
    %s24 = sphi 0, %s21
    %s25 = sphi 0, %s24
    %s41 = sphi 0, %s25
    %s45 = sphi 0, %s45
    %s47 = sphi 0, %s45
    %s48 = sphi 0, %s47
    %s62 = sphi 0, %s48
    %s68 = sphi 0, %s70
    %s71 = sphi 0, %s68
    %s72 = sphi 0, %s71
    %s88 = sphi 0, %s72
    %s94 = sphi 0, %s96
    %s97 = sphi 0, %s94
    %s98 = sphi 0, %s97
    %s114 = sphi 0, %s98
    %s120 = sphi 0, %s122
    %s123 = sphi 0, %s120
    %s124 = sphi 0, %s123
    %s140 = sphi 0, %s124
  $region4: #{se_basic_block.3} parent=0 // loop_header_branch
    %14 = sbr.rel (%p12) target = $region8
  $region5: #{se_basic_block.3} parent=0 // loop_body
    %s16 = ssub.s32 %s11, 1
    %s17 = ssub.s32 %s11, 2
    %s18 = sadd.s32 %s11, 1
    %s19 = ssub.s32 %s11, %s18
    %p20 = scmp.eq.s32.totalorder %s19, 0
    %s22 = sadd.s32 %s21, 1
    %s23 = scalar_select %p20, %s21, %s22
    %p26 = pneg %p20
    %p27 = scmp.eq.s32.totalorder %s11, 1
    %p28 = por %p26, %p27
    %p29 = scmp.ne.s32.totalorder %s21, %s24
    %p30 = scmp.eq.s32.totalorder %s11, 0
    %p31 = por %p29, %p30
    %p32 = scmp.ne.s32.totalorder %s21, %s24
    %p33 = scmp.eq.s32.totalorder %s16, 1
    %p34 = por %p32, %p33
    %p35 = scmp.ne.s32.totalorder %s24, %s25
    %p36 = scmp.eq.s32.totalorder %s16, 0
    %p37 = por %p35, %p36
    %p38 = scmp.ne.s32.totalorder %s24, %s25
    %p39 = scmp.eq.s32.totalorder %s17, 1
    %p40 = por %p38, %p39
    %p42 = scmp.ne.s32.totalorder %s25, %s41
    %p43 = scmp.eq.s32.totalorder %s17, 0
    %p44 = por %p42, %p43
    %s46 = sadd.s32 %s45, 1
    %p49 = scmp.eq.s32.totalorder %s11, 1
    %p50 = scmp.ne.s32.totalorder %s45, %s47
    %p51 = scmp.eq.s32.totalorder %s11, 0
    %p52 = por %p50, %p51
    %p53 = scmp.ne.s32.totalorder %s45, %s47
    %p54 = scmp.eq.s32.totalorder %s16, 1
    %p55 = por %p53, %p54
    %p56 = scmp.ne.s32.totalorder %s47, %s48
    %p57 = scmp.eq.s32.totalorder %s16, 0
    %p58 = por %p56, %p57
    %p59 = scmp.ne.s32.totalorder %s47, %s48
    %p60 = scmp.eq.s32.totalorder %s17, 1
    %p61 = por %p59, %p60
    %p63 = scmp.ne.s32.totalorder %s48, %s62
    %p64 = scmp.eq.s32.totalorder %s17, 0
    %p65 = por %p63, %p64
    %s66 = ssub.s32 %s11, %s18
    %p67 = scmp.eq.s32.totalorder %s66, 0
    %s69 = sadd.s32 %s68, 1
    %s70 = scalar_select %p67, %s68, %s69
    %p73 = pneg %p67
    %p74 = scmp.eq.s32.totalorder %s11, 1
    %p75 = por %p73, %p74
    %p76 = scmp.ne.s32.totalorder %s68, %s71
    %p77 = scmp.eq.s32.totalorder %s11, 0
    %p78 = por %p76, %p77
    %p79 = scmp.ne.s32.totalorder %s68, %s71
    %p80 = scmp.eq.s32.totalorder %s16, 1
    %p81 = por %p79, %p80
    %p82 = scmp.ne.s32.totalorder %s71, %s72
    %p83 = scmp.eq.s32.totalorder %s16, 0
    %p84 = por %p82, %p83
    %p85 = scmp.ne.s32.totalorder %s71, %s72
    %p86 = scmp.eq.s32.totalorder %s17, 1
    %p87 = por %p85, %p86
    %p89 = scmp.ne.s32.totalorder %s72, %s88
    %p90 = scmp.eq.s32.totalorder %s17, 0
    %p91 = por %p89, %p90
    %s92 = ssub.s32 %s11, %s18
    %p93 = scmp.eq.s32.totalorder %s92, 0
    %s95 = sadd.s32 %s94, 1
    %s96 = scalar_select %p93, %s94, %s95
    %p99 = pneg %p93
    %p100 = scmp.eq.s32.totalorder %s11, 1
    %p101 = por %p99, %p100
    %p102 = scmp.ne.s32.totalorder %s94, %s97
    %p103 = scmp.eq.s32.totalorder %s11, 0
    %p104 = por %p102, %p103
    %p105 = scmp.ne.s32.totalorder %s94, %s97
    %p106 = scmp.eq.s32.totalorder %s16, 1
    %p107 = por %p105, %p106
    %p108 = scmp.ne.s32.totalorder %s97, %s98
    %p109 = scmp.eq.s32.totalorder %s16, 0
    %p110 = por %p108, %p109
    %p111 = scmp.ne.s32.totalorder %s97, %s98
    %p112 = scmp.eq.s32.totalorder %s17, 1
    %p113 = por %p111, %p112
    %p115 = scmp.ne.s32.totalorder %s98, %s114
    %p116 = scmp.eq.s32.totalorder %s17, 0
    %p117 = por %p115, %p116
    %s118 = ssub.s32 %s11, %s18
    %p119 = scmp.eq.s32.totalorder %s118, 0
    %s121 = sadd.s32 %s120, 1
    %s122 = scalar_select %p119, %s120, %s121
    %p125 = pneg %p119
    %p126 = scmp.eq.s32.totalorder %s11, 1
    %p127 = por %p125, %p126
    %p128 = scmp.ne.s32.totalorder %s120, %s123
    %p129 = scmp.eq.s32.totalorder %s11, 0
    %p130 = por %p128, %p129
    %p131 = scmp.ne.s32.totalorder %s120, %s123
    %p132 = scmp.eq.s32.totalorder %s16, 1
    %p133 = por %p131, %p132
    %p134 = scmp.ne.s32.totalorder %s123, %s124
    %p135 = scmp.eq.s32.totalorder %s16, 0
    %p136 = por %p134, %p135
    %p137 = scmp.ne.s32.totalorder %s123, %s124
    %p138 = scmp.eq.s32.totalorder %s17, 1
    %p139 = por %p137, %p138
    %p141 = scmp.ne.s32.totalorder %s124, %s140
    %p142 = scmp.eq.s32.totalorder %s17, 0
    %p143 = por %p141, %p142
    %p144 = scmp.le.s32.totalorder 1, %s11
    %p145 = scmp.lt.s32.totalorder %s11, 3
    %p146 = pnand %p144, %p145
    %p147 = pneg %p146
    // Predicated region
    $region9: #{se_basic_block.3} parent=5 // pred_check
      _
    $region10: #{se_basic_block.3} parent=5 // pred_check_branch
      %149 = sbr.rel (%p146) target = $region12
    $region11: #{se_basic_block.3} parent=5 // pred_region
      %s150 = ssub.s32 %s11, 1
      // Predicated region
      $region13: #{se_basic_block.3} parent=11 // pred_check
        %p151 = pneg %p58
      $region14: #{se_basic_block.3} parent=11 // pred_check_branch
        %153 = sbr.rel (%p151) target = $region16
      $region15: #{se_basic_block.3} parent=11 // pred_region
        _
      $region16: #{se_basic_block.3} parent=11 // pred_fallthru
        _
    $region12: #{se_basic_block.3} parent=5 // pred_fallthru
      _
    %p154 = scmp.lt.s32.totalorder %s11, 2
    // Predicated region
    $region17: #{se_basic_block.3} parent=5 // pred_check
      %p155 = pneg %p154
    $region18: #{se_basic_block.3} parent=5 // pred_check_branch
      %157 = sbr.rel (%p155) target = $region20
    $region19: #{se_basic_block.3} parent=5 // pred_region
      // Predicated region
      $region21: #{se_basic_block.3} parent=19 // pred_check
        %p158 = pneg %p31
      $region22: #{se_basic_block.3} parent=19 // pred_check_branch
        %160 = sbr.rel (%p158) target = $region24
      $region23: #{se_basic_block.3} parent=19 // pred_region
        %p161 = scmp.lt.s32.totalorder %s11, 1
        %s162 = scalar_select %p161, %s11, 1
        %s163 = smul.addr %s162, 8
        %s164 = scalar_lea.vmem %s0, %s163
      $region24: #{se_basic_block.3} parent=19 // pred_fallthru
        _
    $region20: #{se_basic_block.3} parent=5 // pred_fallthru
      _
    %p165 = scmp.le.s32.totalorder 1, %s11
    %p166 = scmp.lt.s32.totalorder %s11, 3
    %p167 = pnand %p165, %p166
    %p168 = pneg %p167
    // Predicated region
    $region25: #{se_basic_block.3} parent=5 // pred_check
      _
    $region26: #{se_basic_block.3} parent=5 // pred_check_branch
      %170 = sbr.rel (%p167) target = $region28
    $region27: #{se_basic_block.3} parent=5 // pred_region
      %s171 = ssub.s32 %s11, 1
      %p172 = scmp.lt.s32.totalorder %s16, 1
      %s173 = scalar_select %p172, %s16, 1
      %s174 = smul.addr %s173, 8
      %s175 = scalar_lea.vmem %s0, %s174
      %p176 = pneg %p37
      %p177 = pneg %p34
      %p178 = pneg %p58
      %p179 = pneg %p55
      %p180 = pneg %p84
      %p181 = pneg %p81
      %p182 = scmp.lt.s32.totalorder %s16, 1
      %s183 = scalar_select %p182, %s16, 1
      %s184 = smul.addr %s183, 8
      %s185 = scalar_lea.vmem %s2, %s184
      %p186 = pneg %p110
      %p187 = pneg %p107
      %p188 = scmp.lt.s32.totalorder %s16, 1
      %s189 = scalar_select %p188, %s16, 1
      %s190 = scalar_lea.vmem %s3, %s189
      %p191 = pneg %p136
      %p192 = pneg %p133
      %p193 = scmp.lt.s32.totalorder %s16, 1
      %s194 = scalar_select %p193, %s16, 1
      %s195 = scalar_lea.vmem %s4, %s194
      %p196 = scmp.lt.s32.totalorder %s16, 1
      %s197 = scalar_select %p196, %s16, 1
      %s198 = smul.addr %s197, 8
      %s199 = scalar_lea.vmem %s0, %s198
      %p200 = scmp.lt.s32.totalorder %s16, 1
      %s201 = scalar_select %p200, %s16, 1
      %s202 = smul.addr %s201, 8
      %s203 = scalar_lea.vmem %s2, %s202
      %p204 = scmp.lt.s32.totalorder %s16, 1
      %s205 = scalar_select %p204, %s16, 1
      %s206 = scalar_lea.vmem %s3, %s205
      %p207 = scmp.lt.s32.totalorder %s16, 1
      %s208 = scalar_select %p207, %s16, 1
      %s209 = scalar_lea.vmem %s4, %s208
      %211 = vst [vmem:[#allocation2] sm:$0x1] 0.0
      %212 = vst [vmem:[#allocation2 + $0x9] sm:$0x1] 0.0
      %v213 = vld [vmem:[%s199] sm:$0xff]
      %214 = vst [vmem:[#allocation2 + $0x1] sm:$0xff] %v213
      %v215 = vld [vmem:[#allocation2] sm:$0xff]
      %v216 = vpack.c.bf16 %v215, %v215
      %v217 = vld [vmem:[%s1] sm:$0xf]
      %v218 = vld [vmem:[%s1 + $0x4] sm:$0xf]
      %v219 = vld [vmem:[%s1 + $0x8] sm:$0xf]
      %v220 = vld [vmem:[%s1 + $0xc] sm:$0xf]
      %v221 = vld [vmem:[%s1 + $0x10] sm:$0xf]
      %v222 = vld [vmem:[%s1 + $0x14] sm:$0xf]
      %v223 = vld [vmem:[%s1 + $0x18] sm:$0xf]
      %v224 = vld [vmem:[%s1 + $0x1c] sm:$0xf]
      %v225 = vld [vmem:[%s1 + $0x20] sm:$0xf]
      %v226 = vld [vmem:[%s1 + $0x24] sm:$0xf]
      %v227 = vld [vmem:[%s1 + $0x28] sm:$0xf]
      %v228 = vld [vmem:[%s1 + $0x2c] sm:$0xf]
      %v229 = vld [vmem:[%s1 + $0x30] sm:$0xf]
      %v230 = vld [vmem:[%s1 + $0x34] sm:$0xf]
      %v231 = vld [vmem:[%s1 + $0x38] sm:$0xf]
      %v232 = vld [vmem:[%s1 + $0x3c] sm:$0xf]
      %v233 = vld [vmem:[#allocation2 + $0x1] sm:$0xff]
      %v234 = vpack.c.bf16 %v233, %v233
      %s235 = scalar_lea.vmem %s1, 64
      %v236 = vld [vmem:[%s235] sm:$0xf]
      %v237 = vld [vmem:[%s235 + $0x4] sm:$0xf]
      %v238 = vld [vmem:[%s235 + $0x8] sm:$0xf]
      %v239 = vld [vmem:[%s235 + $0xc] sm:$0xf]
      %v240 = vld [vmem:[%s235 + $0x10] sm:$0xf]
      %v241 = vld [vmem:[%s235 + $0x14] sm:$0xf]
      %v242 = vld [vmem:[%s235 + $0x18] sm:$0xf]
      %v243 = vld [vmem:[%s235 + $0x1c] sm:$0xf]
      %v244 = vld [vmem:[%s235 + $0x20] sm:$0xf]
      %v245 = vld [vmem:[%s235 + $0x24] sm:$0xf]
      %v246 = vld [vmem:[%s235 + $0x28] sm:$0xf]
      %v247 = vld [vmem:[%s235 + $0x2c] sm:$0xf]
      %v248 = vld [vmem:[%s235 + $0x30] sm:$0xf]
      %v249 = vld [vmem:[%s235 + $0x34] sm:$0xf]
      %v250 = vld [vmem:[%s235 + $0x38] sm:$0xf]
      %v251 = vld [vmem:[%s235 + $0x3c] sm:$0xf]
      %v268 = vunpack.c.l.b16 %v236
      %v269 = vunpack.c.l.b16 %v237
      %v270 = vunpack.c.l.b16 %v238
      %v271 = vunpack.c.l.b16 %v239
      %v272 = vunpack.c.l.b16 %v240
      %v273 = vunpack.c.l.b16 %v241
      %v274 = vunpack.c.l.b16 %v242
      %v275 = vunpack.c.l.b16 %v243
      %v276 = vunpack.c.l.b16 %v244
      %v277 = vunpack.c.l.b16 %v245
      %v278 = vunpack.c.l.b16 %v246
      %v279 = vunpack.c.l.b16 %v247
      %v280 = vunpack.c.l.b16 %v248
      %v281 = vunpack.c.l.b16 %v249
      %v282 = vunpack.c.l.b16 %v250
      %v283 = vunpack.c.l.b16 %v251
      %v284 = vpack.c.b16 %v269, %v268
      %v285 = vpack.c.b16 %v271, %v270
      %v286 = vpack.c.b16 %v273, %v272
      %v287 = vpack.c.b16 %v275, %v274
      %v288 = vpack.c.b16 %v277, %v276
      %v289 = vpack.c.b16 %v279, %v278
      %v290 = vpack.c.b16 %v281, %v280
      %v291 = vpack.c.b16 %v283, %v282
      %300 = vmatprep.subr.bf16.mxu0 0
      %301 = vmatpush1.bf16.msra.mxu0 %v284
      %302 = vmatprep.subr.bf16.mxu0 0
      %303 = vmatpush1.bf16.msra.mxu0 %v285
      %304 = vmatprep.subr.bf16.mxu0 0
      %305 = vmatpush1.bf16.msra.mxu0 %v286
      %306 = vmatprep.subr.bf16.mxu0 0
      %307 = vmatpush1.bf16.msra.mxu0 %v287
      %308 = vmatprep.subr.bf16.mxu0 0
      %309 = vmatpush1.bf16.msra.mxu0 %v288
      %310 = vmatprep.subr.bf16.mxu0 0
      %311 = vmatpush1.bf16.msra.mxu0 %v289
      %312 = vmatprep.subr.bf16.mxu0 0
      %313 = vmatpush1.bf16.msra.mxu0 %v290
      %314 = vmatprep.subr.bf16.mxu0 0
      %315 = vmatpush1.bf16.msra.mxu0 %v291
      %316 = vmatprep.subr.bf16.mxu0 0
      %317 = vmatpush1.bf16.msra.mxu0 0
      %318 = vmatprep.subr.bf16.mxu0 0
      %319 = vmatpush1.bf16.msra.mxu0 0
      %320 = vmatprep.subr.bf16.mxu0 0
      %321 = vmatpush1.bf16.msra.mxu0 0
      %322 = vmatprep.subr.bf16.mxu0 0
      %323 = vmatpush1.bf16.msra.mxu0 0
      %324 = vmatprep.subr.bf16.mxu0 0
      %325 = vmatpush1.bf16.msra.mxu0 0
      %326 = vmatprep.subr.bf16.mxu0 0
      %327 = vmatpush1.bf16.msra.mxu0 0
      %328 = vmatprep.subr.bf16.mxu0 0
      %329 = vmatpush1.bf16.msra.mxu0 0
      %330 = vmatprep.subr.bf16.mxu0 0
      %331 = vmatpush1.bf16.msra.mxu0 0
      %332 = vmatprep.mubr.bf16.mxu0 0
      %333 = vmatmul.mubr.bf16.gmra.mrb[0].mxu0 %v234
      %v334 = vpop.f32.mrb[0].mxu0
      %v335 = vadd.f32 0.0, %v334
      %v336 = vpop.f32.mrb[0].mxu0
      %v337 = vpop.f32.mrb[0].mxu0
      %v338 = vpop.f32.mrb[0].mxu0
      %339 = vdwg.mxu0
      %v356 = vunpack.c.l.b16 %v217
      %v357 = vunpack.c.l.b16 %v218
      %v358 = vunpack.c.l.b16 %v219
      %v359 = vunpack.c.l.b16 %v220
      %v360 = vunpack.c.l.b16 %v221
      %v361 = vunpack.c.l.b16 %v222
      %v362 = vunpack.c.l.b16 %v223
      %v363 = vunpack.c.l.b16 %v224
      %v364 = vunpack.c.l.b16 %v225
      %v365 = vunpack.c.l.b16 %v226
      %v366 = vunpack.c.l.b16 %v227
      %v367 = vunpack.c.l.b16 %v228
      %v368 = vunpack.c.l.b16 %v229
      %v369 = vunpack.c.l.b16 %v230
      %v370 = vunpack.c.l.b16 %v231
      %v371 = vunpack.c.l.b16 %v232
      %v372 = vpack.c.b16 %v357, %v356
      %v373 = vpack.c.b16 %v359, %v358
      %v374 = vpack.c.b16 %v361, %v360
      %v375 = vpack.c.b16 %v363, %v362
      %v376 = vpack.c.b16 %v365, %v364
      %v377 = vpack.c.b16 %v367, %v366
      %v378 = vpack.c.b16 %v369, %v368
      %v379 = vpack.c.b16 %v371, %v370
      %388 = vmatprep.subr.bf16.mxu0 0
      %389 = vmatpush1.bf16.msra.mxu0 %v372
      %390 = vmatprep.subr.bf16.mxu0 0
      %391 = vmatpush1.bf16.msra.mxu0 %v373
      %392 = vmatprep.subr.bf16.mxu0 0
      %393 = vmatpush1.bf16.msra.mxu0 %v374
      %394 = vmatprep.subr.bf16.mxu0 0
      %395 = vmatpush1.bf16.msra.mxu0 %v375
      %396 = vmatprep.subr.bf16.mxu0 0
      %397 = vmatpush1.bf16.msra.mxu0 %v376
      %398 = vmatprep.subr.bf16.mxu0 0
      %399 = vmatpush1.bf16.msra.mxu0 %v377
      %400 = vmatprep.subr.bf16.mxu0 0
      %401 = vmatpush1.bf16.msra.mxu0 %v378
      %402 = vmatprep.subr.bf16.mxu0 0
      %403 = vmatpush1.bf16.msra.mxu0 %v379
      %404 = vmatprep.subr.bf16.mxu0 0
      %405 = vmatpush1.bf16.msra.mxu0 0
      %406 = vmatprep.subr.bf16.mxu0 0
      %407 = vmatpush1.bf16.msra.mxu0 0
      %408 = vmatprep.subr.bf16.mxu0 0
      %409 = vmatpush1.bf16.msra.mxu0 0
      %410 = vmatprep.subr.bf16.mxu0 0
      %411 = vmatpush1.bf16.msra.mxu0 0
      %412 = vmatprep.subr.bf16.mxu0 0
      %413 = vmatpush1.bf16.msra.mxu0 0
      %414 = vmatprep.subr.bf16.mxu0 0
      %415 = vmatpush1.bf16.msra.mxu0 0
      %416 = vmatprep.subr.bf16.mxu0 0
      %417 = vmatpush1.bf16.msra.mxu0 0
      %418 = vmatprep.subr.bf16.mxu0 0
      %419 = vmatpush1.bf16.msra.mxu0 0
      %420 = vmatprep.mubr.bf16.mxu0 0
      %421 = vmatmul.mubr.bf16.gmra.mrb[0].mxu0 %v216
      %v422 = vpop.f32.mrb[0].mxu0
      %v423 = vadd.f32 %v335, %v422
      %v424 = vpop.f32.mrb[0].mxu0
      %v425 = vpop.f32.mrb[0].mxu0
      %v426 = vpop.f32.mrb[0].mxu0
      %427 = vdwg.mxu0
      %v428 = vld [vmem:[#allocation2 + $0x2] sm:$0xff]
      %v429 = vpack.c.bf16 %v428, %v428
      %s430 = scalar_lea.vmem %s1, 128
      %v431 = vld [vmem:[%s430] sm:$0xf]
      %v432 = vld [vmem:[%s430 + $0x4] sm:$0xf]
      %v433 = vld [vmem:[%s430 + $0x8] sm:$0xf]
      %v434 = vld [vmem:[%s430 + $0xc] sm:$0xf]
      %v435 = vld [vmem:[%s430 + $0x10] sm:$0xf]
      %v436 = vld [vmem:[%s430 + $0x14] sm:$0xf]
      %v437 = vld [vmem:[%s430 + $0x18] sm:$0xf]
      %v438 = vld [vmem:[%s430 + $0x1c] sm:$0xf]
      %v439 = vld [vmem:[%s430 + $0x20] sm:$0xf]
      %v440 = vld [vmem:[%s430 + $0x24] sm:$0xf]
      %v441 = vld [vmem:[%s430 + $0x28] sm:$0xf]
      %v442 = vld [vmem:[%s430 + $0x2c] sm:$0xf]
      %v443 = vld [vmem:[%s430 + $0x30] sm:$0xf]
      %v444 = vld [vmem:[%s430 + $0x34] sm:$0xf]
      %v445 = vld [vmem:[%s430 + $0x38] sm:$0xf]
      %v446 = vld [vmem:[%s430 + $0x3c] sm:$0xf]
      %v463 = vunpack.c.l.b16 %v431
      %v464 = vunpack.c.l.b16 %v432
      %v465 = vunpack.c.l.b16 %v433
      %v466 = vunpack.c.l.b16 %v434
      %v467 = vunpack.c.l.b16 %v435
      %v468 = vunpack.c.l.b16 %v436
      %v469 = vunpack.c.l.b16 %v437
      %v470 = vunpack.c.l.b16 %v438
      %v471 = vunpack.c.l.b16 %v439
      %v472 = vunpack.c.l.b16 %v440
      %v473 = vunpack.c.l.b16 %v441
      %v474 = vunpack.c.l.b16 %v442
      %v475 = vunpack.c.l.b16 %v443
      %v476 = vunpack.c.l.b16 %v444
      %v477 = vunpack.c.l.b16 %v445
      %v478 = vunpack.c.l.b16 %v446
      %v479 = vpack.c.b16 %v464, %v463
      %v480 = vpack.c.b16 %v466, %v465
      %v481 = vpack.c.b16 %v468, %v467
      %v482 = vpack.c.b16 %v470, %v469
      %v483 = vpack.c.b16 %v472, %v471
      %v484 = vpack.c.b16 %v474, %v473
      %v485 = vpack.c.b16 %v476, %v475
      %v486 = vpack.c.b16 %v478, %v477
      %495 = vmatprep.subr.bf16.mxu0 0
      %496 = vmatpush1.bf16.msra.mxu0 %v479
      %497 = vmatprep.subr.bf16.mxu0 0
      %498 = vmatpush1.bf16.msra.mxu0 %v480
      %499 = vmatprep.subr.bf16.mxu0 0
      %500 = vmatpush1.bf16.msra.mxu0 %v481
      %501 = vmatprep.subr.bf16.mxu0 0
      %502 = vmatpush1.bf16.msra.mxu0 %v482
      %503 = vmatprep.subr.bf16.mxu0 0
      %504 = vmatpush1.bf16.msra.mxu0 %v483
      %505 = vmatprep.subr.bf16.mxu0 0
      %506 = vmatpush1.bf16.msra.mxu0 %v484
      %507 = vmatprep.subr.bf16.mxu0 0
      %508 = vmatpush1.bf16.msra.mxu0 %v485
      %509 = vmatprep.subr.bf16.mxu0 0
      %510 = vmatpush1.bf16.msra.mxu0 %v486
      %511 = vmatprep.subr.bf16.mxu0 0
      %512 = vmatpush1.bf16.msra.mxu0 0
      %513 = vmatprep.subr.bf16.mxu0 0
      %514 = vmatpush1.bf16.msra.mxu0 0
      %515 = vmatprep.subr.bf16.mxu0 0
      %516 = vmatpush1.bf16.msra.mxu0 0
      %517 = vmatprep.subr.bf16.mxu0 0
      %518 = vmatpush1.bf16.msra.mxu0 0
      %519 = vmatprep.subr.bf16.mxu0 0
      %520 = vmatpush1.bf16.msra.mxu0 0
      %521 = vmatprep.subr.bf16.mxu0 0
      %522 = vmatpush1.bf16.msra.mxu0 0
      %523 = vmatprep.subr.bf16.mxu0 0
      %524 = vmatpush1.bf16.msra.mxu0 0
      %525 = vmatprep.subr.bf16.mxu0 0
      %526 = vmatpush1.bf16.msra.mxu0 0
      %527 = vmatprep.mubr.bf16.mxu0 0
      %528 = vmatmul.mubr.bf16.gmra.mrb[0].mxu0 %v429
      %v529 = vpop.f32.mrb[0].mxu0
      %v530 = vadd.f32 0.0, %v529
      %v531 = vpop.f32.mrb[0].mxu0
      %v532 = vpop.f32.mrb[0].mxu0
      %v533 = vpop.f32.mrb[0].mxu0
      %534 = vdwg.mxu0
      %v535 = vadd.f32 %v423, %v530
      %v536 = vmax.f32 %v535, 0.0
      %537 = vst [vmem:[%s203] sm:$0xff] %v536
      %v538 = vrot.slane %v536, 4
      %v539 = vadd.f32 %v536, %v538
      %v540 = vrot.slane %v539, 2
      %v541 = vadd.f32 %v539, %v540
      %v542 = vrot.slane %v541, 1
      %v543 = vadd.f32 %v541, %v542
      %544 = vst [vmem:[%s206] sm:$0x1] %v543
      %v545 = vmul.f32 %v536, %v536
      %v546 = vrot.slane %v545, 4
      %v547 = vadd.f32 %v545, %v546
      %v548 = vrot.slane %v547, 2
      %v549 = vadd.f32 %v547, %v548
      %v550 = vrot.slane %v549, 1
      %v551 = vadd.f32 %v549, %v550
      %552 = vst [vmem:[%s209] sm:$0x1] %v551
      %p553 = scmp.lt.s32.totalorder %s16, 1
      %s554 = scalar_select %p553, %s16, 1
      %s555 = smul.addr %s554, 8
      %s556 = scalar_lea.vmem %s2, %s555
      %p557 = scmp.lt.s32.totalorder %s16, 1
      %s558 = scalar_select %p557, %s16, 1
      %s559 = scalar_lea.vmem %s3, %s558
      %p560 = scmp.lt.s32.totalorder %s16, 1
      %s561 = scalar_select %p560, %s16, 1
      %s562 = scalar_lea.vmem %s4, %s561
      // Predicated region
      $region29: #{se_basic_block.3} parent=27 // pred_check
        %p563 = pneg %p81
      $region30: #{se_basic_block.3} parent=27 // pred_check_branch
        %565 = sbr.rel (%p563) target = $region32
      $region31: #{se_basic_block.3} parent=27 // pred_region
        _
      $region32: #{se_basic_block.3} parent=27 // pred_fallthru
        _
      // Predicated region
      $region33: #{se_basic_block.3} parent=27 // pred_check
        %p566 = pneg %p107
      $region34: #{se_basic_block.3} parent=27 // pred_check_branch
        %568 = sbr.rel (%p566) target = $region36
      $region35: #{se_basic_block.3} parent=27 // pred_region
        _
      $region36: #{se_basic_block.3} parent=27 // pred_fallthru
        _
      // Predicated region
      $region37: #{se_basic_block.3} parent=27 // pred_check
        %p569 = pneg %p133
      $region38: #{se_basic_block.3} parent=27 // pred_check_branch
        %571 = sbr.rel (%p569) target = $region40
      $region39: #{se_basic_block.3} parent=27 // pred_region
        _
      $region40: #{se_basic_block.3} parent=27 // pred_fallthru
        _
    $region28: #{se_basic_block.3} parent=5 // pred_fallthru
      _
    %p572 = scmp.le.s32.totalorder 2, %s11
    // Predicated region
    $region41: #{se_basic_block.3} parent=5 // pred_check
      %p573 = pneg %p572
    $region42: #{se_basic_block.3} parent=5 // pred_check_branch
      %575 = sbr.rel (%p573) target = $region44
    $region43: #{se_basic_block.3} parent=5 // pred_region
      %s576 = ssub.s32 %s11, 2
      // Predicated region
      $region45: #{se_basic_block.3} parent=43 // pred_check
        %p577 = pneg %p87
      $region46: #{se_basic_block.3} parent=43 // pred_check_branch
        %579 = sbr.rel (%p577) target = $region48
      $region47: #{se_basic_block.3} parent=43 // pred_region
        %p580 = scmp.lt.s32.totalorder %s17, 1
        %s581 = scalar_select %p580, %s17, 1
        %s582 = smul.addr %s581, 8
        %s583 = scalar_lea.vmem %s2, %s582
      $region48: #{se_basic_block.3} parent=43 // pred_fallthru
        _
      // Predicated region
      $region49: #{se_basic_block.3} parent=43 // pred_check
        %p584 = pneg %p113
      $region50: #{se_basic_block.3} parent=43 // pred_check_branch
        %586 = sbr.rel (%p584) target = $region52
      $region51: #{se_basic_block.3} parent=43 // pred_region
        %p587 = scmp.lt.s32.totalorder %s17, 1
        %s588 = scalar_select %p587, %s17, 1
        %s589 = scalar_lea.vmem %s3, %s588
      $region52: #{se_basic_block.3} parent=43 // pred_fallthru
        _
      // Predicated region
      $region53: #{se_basic_block.3} parent=43 // pred_check
        %p590 = pneg %p139
      $region54: #{se_basic_block.3} parent=43 // pred_check_branch
        %592 = sbr.rel (%p590) target = $region56
      $region55: #{se_basic_block.3} parent=43 // pred_region
        %p593 = scmp.lt.s32.totalorder %s17, 1
        %s594 = scalar_select %p593, %s17, 1
        %s595 = scalar_lea.vmem %s4, %s594
      $region56: #{se_basic_block.3} parent=43 // pred_fallthru
        _
    $region44: #{se_basic_block.3} parent=5 // pred_fallthru
      _
  $region6: #{se_basic_block.3} parent=0 // loop_footer
    %s15 = sadd.s32 1, %s11
  $region7: #{se_basic_block.3} parent=0 // loop_footer_branch
    %10 = sbr.rel target = $region3
  $region8: #{se_basic_block.3} parent=0 // loop_exit
    _

// kernel: tile.33
$region0: #{tile.33}
  #allocation0 [shape = 's32[1]{0}', space=sflag, size = 0x4, scoped, tag = 'scoped memory for tile.33']
  %s0 = inlined_call_operand.vmem [shape: f32[16], index: 0, kind: input, shape index: {}]
  %s1 = inlined_call_operand.vmem [shape: f32[8,16], index: 1, kind: output, shape index: {}]
  // Predicated region
  $region2: #{tile.33} parent=0 // pred_check
    _
  $region3: #{tile.33} parent=0 // pred_check_branch
    %3 = sbr.rel (0) target = $region5
  $region4: #{tile.33} parent=0 // pred_region
    _
  $region5: #{tile.33} parent=0 // pred_fallthru
    _
  %v4 = vld [vmem:[%s0] ss:$0 sm:$0xff]
  %5 = vst [vmem:[%s1] sm:$0xff] %v4

// kernel: tile.34
$region0: #{tile.34}
  %s0 = inlined_call_operand.vmem [shape: f32[8,16], index: 0, kind: input, shape index: {}]
  %s1 = inlined_call_operand.vmem [shape: f32[1,128], index: 1, kind: output, shape index: {}]
  $region1: #{tile.34} parent=0
    #allocation0 [shape = 'u8[4096]{0}', space=vmem, size = 0x1000, scoped, tag = 'scoped mem for output reshape']
    %v2 = vld [vmem:[%s0] sm:$0x1]
    %vm3 = vcmask 130048
    %4 = vst.msk [vmem:[#allocation0] sm:$0x1] %vm3, %v2
    %s5 = scalar_lea.vmem %s0, 7
    %v6 = vld [vmem:[%s5] sm:$0x1]
    %7 = vrot.lane.b32.xlu0 %v6, 112
    %v8 = vpop.permute.xlu0 %7
    %vm9 = vcmask 1048448
    %10 = vst.msk [vmem:[#allocation0] sm:$0x1] %vm9, %v8
    %s11 = scalar_lea.vmem %s0, 6
    %v12 = vld [vmem:[%s11] sm:$0x1]
    %13 = vrot.lane.b32.xlu0 %v12, 96
    %v14 = vpop.permute.xlu0 %13
    %vm15 = vcmask 917248
    %16 = vst.msk [vmem:[#allocation0] sm:$0x1] %vm15, %v14
    %s17 = scalar_lea.vmem %s0, 5
    %v18 = vld [vmem:[%s17] sm:$0x1]
    %19 = vrot.lane.b32.xlu0 %v18, 80
    %v20 = vpop.permute.xlu0 %19
    %vm21 = vcmask 786048
    %22 = vst.msk [vmem:[#allocation0] sm:$0x1] %vm21, %v20
    %s23 = scalar_lea.vmem %s0, 4
    %v24 = vld [vmem:[%s23] sm:$0x1]
    %25 = vrot.lane.b32.xlu0 %v24, 64
    %v26 = vpop.permute.xlu0 %25
    %vm27 = vcmask 654848
    %28 = vst.msk [vmem:[#allocation0] sm:$0x1] %vm27, %v26
    %s29 = scalar_lea.vmem %s0, 3
    %v30 = vld [vmem:[%s29] sm:$0x1]
    %31 = vrot.lane.b32.xlu0 %v30, 48
    %v32 = vpop.permute.xlu0 %31
    %vm33 = vcmask 523648
    %34 = vst.msk [vmem:[#allocation0] sm:$0x1] %vm33, %v32
    %s35 = scalar_lea.vmem %s0, 2
    %v36 = vld [vmem:[%s35] sm:$0x1]
    %37 = vrot.lane.b32.xlu0 %v36, 32
    %v38 = vpop.permute.xlu0 %37
    %vm39 = vcmask 392448
    %40 = vst.msk [vmem:[#allocation0] sm:$0x1] %vm39, %v38
    %s41 = scalar_lea.vmem %s0, 1
    %v42 = vld [vmem:[%s41] sm:$0x1]
    %43 = vrot.lane.b32.xlu0 %v42, 16
    %v44 = vpop.permute.xlu0 %43
    %vm45 = vcmask 261248
    %46 = vst.msk [vmem:[#allocation0] sm:$0x1] %vm45, %v44
    %s48 = sshllo.u32 0, 1
    %v50 = vld [vmem:[#allocation0] sm:%s48]
    %s51 = sshllo.u32 0, 1
    %52 = vst [vmem:[%s1] sm:%s51] %v50

// kernel: tile.54
$region0: #{tile.54}
  %s0 = inlined_call_operand.vmem [shape: f32[2,8,16], index: 0, kind: input, shape index: {}]
  %s1 = inlined_call_operand.vmem [shape: f32[2,128], index: 1, kind: output, shape index: {}]
  $region1: #{tile.54} parent=0
    #allocation0 [shape = 'u8[4096]{0}', space=vmem, size = 0x1000, scoped, tag = 'scoped mem for output reshape']
    %s2 = smov 3
    %v3 = vld [vmem:[%s0] ss:$8 sm:%s2]
    %vm4 = vcmask 130048
    %5 = vst.msk [vmem:[#allocation0] sm:$0x3] %vm4, %v3
    %s6 = scalar_lea.vmem %s0, 7
    %s7 = smov 3
    %v8 = vld [vmem:[%s6] ss:$8 sm:%s7]
    %9 = vrot.lane.b32.xlu0 %v8, 112
    %v10 = vpop.permute.xlu0 %9
    %vm11 = vcmask 1048448
    %12 = vst.msk [vmem:[#allocation0] sm:$0x3] %vm11, %v10
    %s13 = scalar_lea.vmem %s0, 6
    %s14 = smov 3
    %v15 = vld [vmem:[%s13] ss:$8 sm:%s14]
    %16 = vrot.lane.b32.xlu0 %v15, 96
    %v17 = vpop.permute.xlu0 %16
    %vm18 = vcmask 917248
    %19 = vst.msk [vmem:[#allocation0] sm:$0x3] %vm18, %v17
    %s20 = scalar_lea.vmem %s0, 5
    %s21 = smov 3
    %v22 = vld [vmem:[%s20] ss:$8 sm:%s21]
    %23 = vrot.lane.b32.xlu0 %v22, 80
    %v24 = vpop.permute.xlu0 %23
    %vm25 = vcmask 786048
    %26 = vst.msk [vmem:[#allocation0] sm:$0x3] %vm25, %v24
    %s27 = scalar_lea.vmem %s0, 4
    %s28 = smov 3
    %v29 = vld [vmem:[%s27] ss:$8 sm:%s28]
    %30 = vrot.lane.b32.xlu0 %v29, 64
    %v31 = vpop.permute.xlu0 %30
    %vm32 = vcmask 654848
    %33 = vst.msk [vmem:[#allocation0] sm:$0x3] %vm32, %v31
    %s34 = scalar_lea.vmem %s0, 3
    %s35 = smov 3
    %v36 = vld [vmem:[%s34] ss:$8 sm:%s35]
    %37 = vrot.lane.b32.xlu0 %v36, 48
    %v38 = vpop.permute.xlu0 %37
    %vm39 = vcmask 523648
    %40 = vst.msk [vmem:[#allocation0] sm:$0x3] %vm39, %v38
    %s41 = scalar_lea.vmem %s0, 2
    %s42 = smov 3
    %v43 = vld [vmem:[%s41] ss:$8 sm:%s42]
    %44 = vrot.lane.b32.xlu0 %v43, 32
    %v45 = vpop.permute.xlu0 %44
    %vm46 = vcmask 392448
    %47 = vst.msk [vmem:[#allocation0] sm:$0x3] %vm46, %v45
    %s48 = scalar_lea.vmem %s0, 1
    %s49 = smov 3
    %v50 = vld [vmem:[%s48] ss:$8 sm:%s49]
    %51 = vrot.lane.b32.xlu0 %v50, 16
    %v52 = vpop.permute.xlu0 %51
    %vm53 = vcmask 261248
    %54 = vst.msk [vmem:[#allocation0] sm:$0x3] %vm53, %v52
    %s56 = sshllo.u32 0, 2
    %v58 = vld [vmem:[#allocation0] sm:%s56]
    %s59 = sshllo.u32 0, 2
    %60 = vst [vmem:[%s1] sm:%s59] %v58

// kernel: se_basic_block.4
$region0: #{se_basic_block.4}
  #allocation0 [shape = 'u32[]', space=smem, size = 0x4, offset = 0x4, fixed_abs, tag = 'smem constant byte address 0x4 - core index']
  #allocation1 [shape = 'u32[144,128]{1,0:T(1,128)}', space=vmem, size = 0x12000, scoped, tag = 'internal scratch']
  #allocation2 [shape = 'f32[10,128]{1,0:T(8,128)}', space=vmem, size = 0x2000, scoped, tag = 'scratch operand']
  %s0 = inlined_call_operand.vmem [shape: f32[2,8,128], index: 0, kind: input, shape index: {}]
  %s1 = inlined_call_operand.vmem [shape: f32[1,128], index: 1, kind: input, shape index: {}]
  %s2 = inlined_call_operand.vmem [shape: f32[1,128], index: 2, kind: input, shape index: {}]
  %s3 = inlined_call_operand.vmem [shape: bf16[3,128,128], index: 3, kind: input, shape index: {}]
  %s4 = inlined_call_operand.vmem [shape: f32[2,8,128], index: 4, kind: output, shape index: {0}]
  %s5 = inlined_call_operand.vmem [shape: f32[2,1,128], index: 5, kind: output, shape index: {1}]
  %s6 = inlined_call_operand.vmem [shape: f32[2,1,128], index: 6, kind: output, shape index: {2}]
  %7 = xla_tuple %s4, %s5, %s6
  %s8 = sld [smem:[#allocation0]]
  $region65: #{se_basic_block.4} parent=0
    _
  %s10 = ssub.s32 1, %s8
  %s11 = scalar_select 0, %s10, %s8
  loop: start=0, step=1, limit=4
  $region2: #{se_basic_block.4} parent=0 // loop_pre_header
    _
  $region3: #{se_basic_block.4} parent=0 // loop_header
    %s13 = sphi 0, %s17
    %p14 = scmp.ge.s32.totalorder %s13, 4
    %s23 = sphi 0, %s25
    %s26 = sphi 0, %s23
    %s27 = sphi 0, %s26
    %s43 = sphi 0, %s27
    %s47 = sphi 0, %s47
    %s49 = sphi 0, %s47
    %s50 = sphi 0, %s49
    %s64 = sphi 0, %s50
    %s68 = sphi 0, %s68
    %s70 = sphi 0, %s68
    %s71 = sphi 0, %s70
    %s85 = sphi 0, %s71
    %s89 = sphi 0, %s89
    %s91 = sphi 0, %s89
    %s92 = sphi 0, %s91
    %s106 = sphi 0, %s92
    %s112 = sphi 0, %s114
    %s115 = sphi 0, %s112
    %s116 = sphi 0, %s115
    %s132 = sphi 0, %s116
    %s138 = sphi 0, %s140
    %s141 = sphi 0, %s138
    %s142 = sphi 0, %s141
    %s158 = sphi 0, %s142
    %s164 = sphi 0, %s166
    %s167 = sphi 0, %s164
    %s168 = sphi 0, %s167
    %s184 = sphi 0, %s168
  $region4: #{se_basic_block.4} parent=0 // loop_header_branch
    %16 = sbr.rel (%p14) target = $region8
  $region5: #{se_basic_block.4} parent=0 // loop_body
    %s18 = ssub.s32 %s13, 1
    %s19 = ssub.s32 %s13, 2
    %s20 = sadd.s32 %s13, 1
    %s21 = ssub.s32 %s13, %s20
    %p22 = scmp.eq.s32.totalorder %s21, 0
    %s24 = sadd.s32 %s23, 1
    %s25 = scalar_select %p22, %s23, %s24
    %p28 = pneg %p22
    %p29 = scmp.eq.s32.totalorder %s13, 1
    %p30 = por %p28, %p29
    %p31 = scmp.ne.s32.totalorder %s23, %s26
    %p32 = scmp.eq.s32.totalorder %s13, 0
    %p33 = por %p31, %p32
    %p34 = scmp.ne.s32.totalorder %s23, %s26
    %p35 = scmp.eq.s32.totalorder %s18, 1
    %p36 = por %p34, %p35
    %p37 = scmp.ne.s32.totalorder %s26, %s27
    %p38 = scmp.eq.s32.totalorder %s18, 0
    %p39 = por %p37, %p38
    %p40 = scmp.ne.s32.totalorder %s26, %s27
    %p41 = scmp.eq.s32.totalorder %s19, 1
    %p42 = por %p40, %p41
    %p44 = scmp.ne.s32.totalorder %s27, %s43
    %p45 = scmp.eq.s32.totalorder %s19, 0
    %p46 = por %p44, %p45
    %s48 = sadd.s32 %s47, 1
    %p51 = scmp.eq.s32.totalorder %s13, 1
    %p52 = scmp.ne.s32.totalorder %s47, %s49
    %p53 = scmp.eq.s32.totalorder %s13, 0
    %p54 = por %p52, %p53
    %p55 = scmp.ne.s32.totalorder %s47, %s49
    %p56 = scmp.eq.s32.totalorder %s18, 1
    %p57 = por %p55, %p56
    %p58 = scmp.ne.s32.totalorder %s49, %s50
    %p59 = scmp.eq.s32.totalorder %s18, 0
    %p60 = por %p58, %p59
    %p61 = scmp.ne.s32.totalorder %s49, %s50
    %p62 = scmp.eq.s32.totalorder %s19, 1
    %p63 = por %p61, %p62
    %p65 = scmp.ne.s32.totalorder %s50, %s64
    %p66 = scmp.eq.s32.totalorder %s19, 0
    %p67 = por %p65, %p66
    %s69 = sadd.s32 %s68, 1
    %p72 = scmp.eq.s32.totalorder %s13, 1
    %p73 = scmp.ne.s32.totalorder %s68, %s70
    %p74 = scmp.eq.s32.totalorder %s13, 0
    %p75 = por %p73, %p74
    %p76 = scmp.ne.s32.totalorder %s68, %s70
    %p77 = scmp.eq.s32.totalorder %s18, 1
    %p78 = por %p76, %p77
    %p79 = scmp.ne.s32.totalorder %s70, %s71
    %p80 = scmp.eq.s32.totalorder %s18, 0
    %p81 = por %p79, %p80
    %p82 = scmp.ne.s32.totalorder %s70, %s71
    %p83 = scmp.eq.s32.totalorder %s19, 1
    %p84 = por %p82, %p83
    %p86 = scmp.ne.s32.totalorder %s71, %s85
    %p87 = scmp.eq.s32.totalorder %s19, 0
    %p88 = por %p86, %p87
    %s90 = sadd.s32 %s89, 1
    %p93 = scmp.eq.s32.totalorder %s13, 1
    %p94 = scmp.ne.s32.totalorder %s89, %s91
    %p95 = scmp.eq.s32.totalorder %s13, 0
    %p96 = por %p94, %p95
    %p97 = scmp.ne.s32.totalorder %s89, %s91
    %p98 = scmp.eq.s32.totalorder %s18, 1
    %p99 = por %p97, %p98
    %p100 = scmp.ne.s32.totalorder %s91, %s92
    %p101 = scmp.eq.s32.totalorder %s18, 0
    %p102 = por %p100, %p101
    %p103 = scmp.ne.s32.totalorder %s91, %s92
    %p104 = scmp.eq.s32.totalorder %s19, 1
    %p105 = por %p103, %p104
    %p107 = scmp.ne.s32.totalorder %s92, %s106
    %p108 = scmp.eq.s32.totalorder %s19, 0
    %p109 = por %p107, %p108
    %s110 = ssub.s32 %s13, %s20
    %p111 = scmp.eq.s32.totalorder %s110, 0
    %s113 = sadd.s32 %s112, 1
    %s114 = scalar_select %p111, %s112, %s113
    %p117 = pneg %p111
    %p118 = scmp.eq.s32.totalorder %s13, 1
    %p119 = por %p117, %p118
    %p120 = scmp.ne.s32.totalorder %s112, %s115
    %p121 = scmp.eq.s32.totalorder %s13, 0
    %p122 = por %p120, %p121
    %p123 = scmp.ne.s32.totalorder %s112, %s115
    %p124 = scmp.eq.s32.totalorder %s18, 1
    %p125 = por %p123, %p124
    %p126 = scmp.ne.s32.totalorder %s115, %s116
    %p127 = scmp.eq.s32.totalorder %s18, 0
    %p128 = por %p126, %p127
    %p129 = scmp.ne.s32.totalorder %s115, %s116
    %p130 = scmp.eq.s32.totalorder %s19, 1
    %p131 = por %p129, %p130
    %p133 = scmp.ne.s32.totalorder %s116, %s132
    %p134 = scmp.eq.s32.totalorder %s19, 0
    %p135 = por %p133, %p134
    %s136 = ssub.s32 %s13, %s20
    %p137 = scmp.eq.s32.totalorder %s136, 0
    %s139 = sadd.s32 %s138, 1
    %s140 = scalar_select %p137, %s138, %s139
    %p143 = pneg %p137
    %p144 = scmp.eq.s32.totalorder %s13, 1
    %p145 = por %p143, %p144
    %p146 = scmp.ne.s32.totalorder %s138, %s141
    %p147 = scmp.eq.s32.totalorder %s13, 0
    %p148 = por %p146, %p147
    %p149 = scmp.ne.s32.totalorder %s138, %s141
    %p150 = scmp.eq.s32.totalorder %s18, 1
    %p151 = por %p149, %p150
    %p152 = scmp.ne.s32.totalorder %s141, %s142
    %p153 = scmp.eq.s32.totalorder %s18, 0
    %p154 = por %p152, %p153
    %p155 = scmp.ne.s32.totalorder %s141, %s142
    %p156 = scmp.eq.s32.totalorder %s19, 1
    %p157 = por %p155, %p156
    %p159 = scmp.ne.s32.totalorder %s142, %s158
    %p160 = scmp.eq.s32.totalorder %s19, 0
    %p161 = por %p159, %p160
    %s162 = ssub.s32 %s13, %s20
    %p163 = scmp.eq.s32.totalorder %s162, 0
    %s165 = sadd.s32 %s164, 1
    %s166 = scalar_select %p163, %s164, %s165
    %p169 = pneg %p163
    %p170 = scmp.eq.s32.totalorder %s13, 1
    %p171 = por %p169, %p170
    %p172 = scmp.ne.s32.totalorder %s164, %s167
    %p173 = scmp.eq.s32.totalorder %s13, 0
    %p174 = por %p172, %p173
    %p175 = scmp.ne.s32.totalorder %s164, %s167
    %p176 = scmp.eq.s32.totalorder %s18, 1
    %p177 = por %p175, %p176
    %p178 = scmp.ne.s32.totalorder %s167, %s168
    %p179 = scmp.eq.s32.totalorder %s18, 0
    %p180 = por %p178, %p179
    %p181 = scmp.ne.s32.totalorder %s167, %s168
    %p182 = scmp.eq.s32.totalorder %s19, 1
    %p183 = por %p181, %p182
    %p185 = scmp.ne.s32.totalorder %s168, %s184
    %p186 = scmp.eq.s32.totalorder %s19, 0
    %p187 = por %p185, %p186
    %p188 = scmp.le.s32.totalorder 1, %s13
    %p189 = scmp.lt.s32.totalorder %s13, 3
    %p190 = pnand %p188, %p189
    %p191 = pneg %p190
    // Predicated region
    $region9: #{se_basic_block.4} parent=5 // pred_check
      _
    $region10: #{se_basic_block.4} parent=5 // pred_check_branch
      %193 = sbr.rel (%p190) target = $region12
    $region11: #{se_basic_block.4} parent=5 // pred_region
      %s194 = ssub.s32 %s13, 1
      // Predicated region
      $region13: #{se_basic_block.4} parent=11 // pred_check
        %p195 = pneg %p60
      $region14: #{se_basic_block.4} parent=11 // pred_check_branch
        %197 = sbr.rel (%p195) target = $region16
      $region15: #{se_basic_block.4} parent=11 // pred_region
        _
      $region16: #{se_basic_block.4} parent=11 // pred_fallthru
        _
      // Predicated region
      $region17: #{se_basic_block.4} parent=11 // pred_check
        %p198 = pneg %p81
      $region18: #{se_basic_block.4} parent=11 // pred_check_branch
        %200 = sbr.rel (%p198) target = $region20
      $region19: #{se_basic_block.4} parent=11 // pred_region
        _
      $region20: #{se_basic_block.4} parent=11 // pred_fallthru
        _
      // Predicated region
      $region21: #{se_basic_block.4} parent=11 // pred_check
        %p201 = pneg %p102
      $region22: #{se_basic_block.4} parent=11 // pred_check_branch
        %203 = sbr.rel (%p201) target = $region24
      $region23: #{se_basic_block.4} parent=11 // pred_region
        _
      $region24: #{se_basic_block.4} parent=11 // pred_fallthru
        _
    $region12: #{se_basic_block.4} parent=5 // pred_fallthru
      _
    %p204 = scmp.lt.s32.totalorder %s13, 2
    // Predicated region
    $region25: #{se_basic_block.4} parent=5 // pred_check
      %p205 = pneg %p204
    $region26: #{se_basic_block.4} parent=5 // pred_check_branch
      %207 = sbr.rel (%p205) target = $region28
    $region27: #{se_basic_block.4} parent=5 // pred_region
      // Predicated region
      $region29: #{se_basic_block.4} parent=27 // pred_check
        %p208 = pneg %p33
      $region30: #{se_basic_block.4} parent=27 // pred_check_branch
        %210 = sbr.rel (%p208) target = $region32
      $region31: #{se_basic_block.4} parent=27 // pred_region
        %p211 = scmp.lt.s32.totalorder %s13, 1
        %s212 = scalar_select %p211, %s13, 1
        %s213 = smul.addr %s212, 8
        %s214 = scalar_lea.vmem %s0, %s213
      $region32: #{se_basic_block.4} parent=27 // pred_fallthru
        _
    $region28: #{se_basic_block.4} parent=5 // pred_fallthru
      _
    %p215 = scmp.le.s32.totalorder 1, %s13
    %p216 = scmp.lt.s32.totalorder %s13, 3
    %p217 = pnand %p215, %p216
    %p218 = pneg %p217
    // Predicated region
    $region33: #{se_basic_block.4} parent=5 // pred_check
      _
    $region34: #{se_basic_block.4} parent=5 // pred_check_branch
      %220 = sbr.rel (%p217) target = $region36
    $region35: #{se_basic_block.4} parent=5 // pred_region
      %s221 = ssub.s32 %s13, 1
      %p222 = scmp.lt.s32.totalorder %s18, 1
      %s223 = scalar_select %p222, %s18, 1
      %s224 = smul.addr %s223, 8
      %s225 = scalar_lea.vmem %s0, %s224
      %p226 = pneg %p39
      %p227 = pneg %p36
      %p228 = pneg %p60
      %p229 = pneg %p57
      %p230 = pneg %p81
      %p231 = pneg %p78
      %p232 = pneg %p102
      %p233 = pneg %p99
      %p234 = pneg %p128
      %p235 = pneg %p125
      %p236 = scmp.lt.s32.totalorder %s18, 1
      %s237 = scalar_select %p236, %s18, 1
      %s238 = smul.addr %s237, 8
      %s239 = scalar_lea.vmem %s4, %s238
      %p240 = pneg %p154
      %p241 = pneg %p151
      %p242 = scmp.lt.s32.totalorder %s18, 1
      %s243 = scalar_select %p242, %s18, 1
      %s244 = scalar_lea.vmem %s5, %s243
      %p245 = pneg %p180
      %p246 = pneg %p177
      %p247 = scmp.lt.s32.totalorder %s18, 1
      %s248 = scalar_select %p247, %s18, 1
      %s249 = scalar_lea.vmem %s6, %s248
      %p250 = scmp.lt.s32.totalorder %s18, 1
      %s251 = scalar_select %p250, %s18, 1
      %s252 = smul.addr %s251, 8
      %s253 = scalar_lea.vmem %s0, %s252
      %p254 = scmp.lt.s32.totalorder %s18, 1
      %s255 = scalar_select %p254, %s18, 1
      %s256 = smul.addr %s255, 8
      %s257 = scalar_lea.vmem %s4, %s256
      %p258 = scmp.lt.s32.totalorder %s18, 1
      %s259 = scalar_select %p258, %s18, 1
      %s260 = scalar_lea.vmem %s5, %s259
      %p261 = scmp.lt.s32.totalorder %s18, 1
      %s262 = scalar_select %p261, %s18, 1
      %s263 = scalar_lea.vmem %s6, %s262
      %265 = vst [vmem:[#allocation2] sm:$0x1] 0.0
      %266 = vst [vmem:[#allocation2 + $0x9] sm:$0x1] 0.0
      %v267 = vld [vmem:[%s253] sm:$0xff]
      %v268 = vld [vmem:[%s1] sm:$0x1]
      %v270 = vlaneseq
      %v271 = vshrl.u32 %v270, 7
      %v272 = vsub.s32 0, %v271
      %v273 = vrot.slane %v268, %v272
      %v275 = vmul.f32 %v267, %v273
      %v276 = vld [vmem:[%s2] sm:$0x1]
      %v278 = vlaneseq
      %v279 = vshrl.u32 %v278, 7
      %v280 = vsub.s32 0, %v279
      %v281 = vrot.slane %v276, %v280
      %v283 = vadd.f32 %v275, %v281
      %284 = vst [vmem:[#allocation2 + $0x1] sm:$0xff] %v283
      %v285 = vld [vmem:[#allocation2] sm:$0xff]
      %v286 = vpack.c.bf16 %v285, %v285
      %v287 = vld [vmem:[%s3] sm:$0xf]
      %v288 = vld [vmem:[%s3 + $0x4] sm:$0xf]
      %v289 = vld [vmem:[%s3 + $0x8] sm:$0xf]
      %v290 = vld [vmem:[%s3 + $0xc] sm:$0xf]
      %v291 = vld [vmem:[%s3 + $0x10] sm:$0xf]
      %v292 = vld [vmem:[%s3 + $0x14] sm:$0xf]
      %v293 = vld [vmem:[%s3 + $0x18] sm:$0xf]
      %v294 = vld [vmem:[%s3 + $0x1c] sm:$0xf]
      %v295 = vld [vmem:[%s3 + $0x20] sm:$0xf]
      %v296 = vld [vmem:[%s3 + $0x24] sm:$0xf]
      %v297 = vld [vmem:[%s3 + $0x28] sm:$0xf]
      %v298 = vld [vmem:[%s3 + $0x2c] sm:$0xf]
      %v299 = vld [vmem:[%s3 + $0x30] sm:$0xf]
      %v300 = vld [vmem:[%s3 + $0x34] sm:$0xf]
      %v301 = vld [vmem:[%s3 + $0x38] sm:$0xf]
      %v302 = vld [vmem:[%s3 + $0x3c] sm:$0xf]
      %v303 = vld [vmem:[#allocation2 + $0x1] sm:$0xff]
      %v304 = vpack.c.bf16 %v303, %v303
      %s305 = scalar_lea.vmem %s3, 64
      %v306 = vld [vmem:[%s305] sm:$0xf]
      %v307 = vld [vmem:[%s305 + $0x4] sm:$0xf]
      %v308 = vld [vmem:[%s305 + $0x8] sm:$0xf]
      %v309 = vld [vmem:[%s305 + $0xc] sm:$0xf]
      %v310 = vld [vmem:[%s305 + $0x10] sm:$0xf]
      %v311 = vld [vmem:[%s305 + $0x14] sm:$0xf]
      %v312 = vld [vmem:[%s305 + $0x18] sm:$0xf]
      %v313 = vld [vmem:[%s305 + $0x1c] sm:$0xf]
      %v314 = vld [vmem:[%s305 + $0x20] sm:$0xf]
      %v315 = vld [vmem:[%s305 + $0x24] sm:$0xf]
      %v316 = vld [vmem:[%s305 + $0x28] sm:$0xf]
      %v317 = vld [vmem:[%s305 + $0x2c] sm:$0xf]
      %v318 = vld [vmem:[%s305 + $0x30] sm:$0xf]
      %v319 = vld [vmem:[%s305 + $0x34] sm:$0xf]
      %v320 = vld [vmem:[%s305 + $0x38] sm:$0xf]
      %v321 = vld [vmem:[%s305 + $0x3c] sm:$0xf]
      %v338 = vunpack.c.l.b16 %v306
      %v339 = vunpack.c.l.b16 %v307
      %v340 = vunpack.c.l.b16 %v308
      %v341 = vunpack.c.l.b16 %v309
      %v342 = vunpack.c.l.b16 %v310
      %v343 = vunpack.c.l.b16 %v311
      %v344 = vunpack.c.l.b16 %v312
      %v345 = vunpack.c.l.b16 %v313
      %v346 = vunpack.c.l.b16 %v314
      %v347 = vunpack.c.l.b16 %v315
      %v348 = vunpack.c.l.b16 %v316
      %v349 = vunpack.c.l.b16 %v317
      %v350 = vunpack.c.l.b16 %v318
      %v351 = vunpack.c.l.b16 %v319
      %v352 = vunpack.c.l.b16 %v320
      %v353 = vunpack.c.l.b16 %v321
      %v354 = vpack.c.b16 %v339, %v338
      %v355 = vpack.c.b16 %v341, %v340
      %v356 = vpack.c.b16 %v343, %v342
      %v357 = vpack.c.b16 %v345, %v344
      %v358 = vpack.c.b16 %v347, %v346
      %v359 = vpack.c.b16 %v349, %v348
      %v360 = vpack.c.b16 %v351, %v350
      %v361 = vpack.c.b16 %v353, %v352
      %370 = vmatprep.subr.bf16.mxu0 0
      %371 = vmatpush1.bf16.msra.mxu0 %v354
      %372 = vmatprep.subr.bf16.mxu0 0
      %373 = vmatpush1.bf16.msra.mxu0 %v355
      %374 = vmatprep.subr.bf16.mxu0 0
      %375 = vmatpush1.bf16.msra.mxu0 %v356
      %376 = vmatprep.subr.bf16.mxu0 0
      %377 = vmatpush1.bf16.msra.mxu0 %v357
      %378 = vmatprep.subr.bf16.mxu0 0
      %379 = vmatpush1.bf16.msra.mxu0 %v358
      %380 = vmatprep.subr.bf16.mxu0 0
      %381 = vmatpush1.bf16.msra.mxu0 %v359
      %382 = vmatprep.subr.bf16.mxu0 0
      %383 = vmatpush1.bf16.msra.mxu0 %v360
      %384 = vmatprep.subr.bf16.mxu0 0
      %385 = vmatpush1.bf16.msra.mxu0 %v361
      %386 = vmatprep.subr.bf16.mxu0 0
      %387 = vmatpush1.bf16.msra.mxu0 0
      %388 = vmatprep.subr.bf16.mxu0 0
      %389 = vmatpush1.bf16.msra.mxu0 0
      %390 = vmatprep.subr.bf16.mxu0 0
      %391 = vmatpush1.bf16.msra.mxu0 0
      %392 = vmatprep.subr.bf16.mxu0 0
      %393 = vmatpush1.bf16.msra.mxu0 0
      %394 = vmatprep.subr.bf16.mxu0 0
      %395 = vmatpush1.bf16.msra.mxu0 0
      %396 = vmatprep.subr.bf16.mxu0 0
      %397 = vmatpush1.bf16.msra.mxu0 0
      %398 = vmatprep.subr.bf16.mxu0 0
      %399 = vmatpush1.bf16.msra.mxu0 0
      %400 = vmatprep.subr.bf16.mxu0 0
      %401 = vmatpush1.bf16.msra.mxu0 0
      %402 = vmatprep.mubr.bf16.mxu0 0
      %403 = vmatmul.mubr.bf16.gmra.mrb[0].mxu0 %v304
      %v404 = vpop.f32.mrb[0].mxu0
      %v405 = vadd.f32 0.0, %v404
      %v406 = vpop.f32.mrb[0].mxu0
      %v407 = vpop.f32.mrb[0].mxu0
      %v408 = vpop.f32.mrb[0].mxu0
      %409 = vdwg.mxu0
      %v426 = vunpack.c.l.b16 %v287
      %v427 = vunpack.c.l.b16 %v288
      %v428 = vunpack.c.l.b16 %v289
      %v429 = vunpack.c.l.b16 %v290
      %v430 = vunpack.c.l.b16 %v291
      %v431 = vunpack.c.l.b16 %v292
      %v432 = vunpack.c.l.b16 %v293
      %v433 = vunpack.c.l.b16 %v294
      %v434 = vunpack.c.l.b16 %v295
      %v435 = vunpack.c.l.b16 %v296
      %v436 = vunpack.c.l.b16 %v297
      %v437 = vunpack.c.l.b16 %v298
      %v438 = vunpack.c.l.b16 %v299
      %v439 = vunpack.c.l.b16 %v300
      %v440 = vunpack.c.l.b16 %v301
      %v441 = vunpack.c.l.b16 %v302
      %v442 = vpack.c.b16 %v427, %v426
      %v443 = vpack.c.b16 %v429, %v428
      %v444 = vpack.c.b16 %v431, %v430
      %v445 = vpack.c.b16 %v433, %v432
      %v446 = vpack.c.b16 %v435, %v434
      %v447 = vpack.c.b16 %v437, %v436
      %v448 = vpack.c.b16 %v439, %v438
      %v449 = vpack.c.b16 %v441, %v440
      %458 = vmatprep.subr.bf16.mxu0 0
      %459 = vmatpush1.bf16.msra.mxu0 %v442
      %460 = vmatprep.subr.bf16.mxu0 0
      %461 = vmatpush1.bf16.msra.mxu0 %v443
      %462 = vmatprep.subr.bf16.mxu0 0
      %463 = vmatpush1.bf16.msra.mxu0 %v444
      %464 = vmatprep.subr.bf16.mxu0 0
      %465 = vmatpush1.bf16.msra.mxu0 %v445
      %466 = vmatprep.subr.bf16.mxu0 0
      %467 = vmatpush1.bf16.msra.mxu0 %v446
      %468 = vmatprep.subr.bf16.mxu0 0
      %469 = vmatpush1.bf16.msra.mxu0 %v447
      %470 = vmatprep.subr.bf16.mxu0 0
      %471 = vmatpush1.bf16.msra.mxu0 %v448
      %472 = vmatprep.subr.bf16.mxu0 0
      %473 = vmatpush1.bf16.msra.mxu0 %v449
      %474 = vmatprep.subr.bf16.mxu0 0
      %475 = vmatpush1.bf16.msra.mxu0 0
      %476 = vmatprep.subr.bf16.mxu0 0
      %477 = vmatpush1.bf16.msra.mxu0 0
      %478 = vmatprep.subr.bf16.mxu0 0
      %479 = vmatpush1.bf16.msra.mxu0 0
      %480 = vmatprep.subr.bf16.mxu0 0
      %481 = vmatpush1.bf16.msra.mxu0 0
      %482 = vmatprep.subr.bf16.mxu0 0
      %483 = vmatpush1.bf16.msra.mxu0 0
      %484 = vmatprep.subr.bf16.mxu0 0
      %485 = vmatpush1.bf16.msra.mxu0 0
      %486 = vmatprep.subr.bf16.mxu0 0
      %487 = vmatpush1.bf16.msra.mxu0 0
      %488 = vmatprep.subr.bf16.mxu0 0
      %489 = vmatpush1.bf16.msra.mxu0 0
      %490 = vmatprep.mubr.bf16.mxu0 0
      %491 = vmatmul.mubr.bf16.gmra.mrb[0].mxu0 %v286
      %v492 = vpop.f32.mrb[0].mxu0
      %v493 = vadd.f32 %v405, %v492
      %v494 = vpop.f32.mrb[0].mxu0
      %v495 = vpop.f32.mrb[0].mxu0
      %v496 = vpop.f32.mrb[0].mxu0
      %497 = vdwg.mxu0
      %v498 = vld [vmem:[#allocation2 + $0x2] sm:$0xff]
      %v499 = vpack.c.bf16 %v498, %v498
      %s500 = scalar_lea.vmem %s3, 128
      %v501 = vld [vmem:[%s500] sm:$0xf]
      %v502 = vld [vmem:[%s500 + $0x4] sm:$0xf]
      %v503 = vld [vmem:[%s500 + $0x8] sm:$0xf]
      %v504 = vld [vmem:[%s500 + $0xc] sm:$0xf]
      %v505 = vld [vmem:[%s500 + $0x10] sm:$0xf]
      %v506 = vld [vmem:[%s500 + $0x14] sm:$0xf]
      %v507 = vld [vmem:[%s500 + $0x18] sm:$0xf]
      %v508 = vld [vmem:[%s500 + $0x1c] sm:$0xf]
      %v509 = vld [vmem:[%s500 + $0x20] sm:$0xf]
      %v510 = vld [vmem:[%s500 + $0x24] sm:$0xf]
      %v511 = vld [vmem:[%s500 + $0x28] sm:$0xf]
      %v512 = vld [vmem:[%s500 + $0x2c] sm:$0xf]
      %v513 = vld [vmem:[%s500 + $0x30] sm:$0xf]
      %v514 = vld [vmem:[%s500 + $0x34] sm:$0xf]
      %v515 = vld [vmem:[%s500 + $0x38] sm:$0xf]
      %v516 = vld [vmem:[%s500 + $0x3c] sm:$0xf]
      %v533 = vunpack.c.l.b16 %v501
      %v534 = vunpack.c.l.b16 %v502
      %v535 = vunpack.c.l.b16 %v503
      %v536 = vunpack.c.l.b16 %v504
      %v537 = vunpack.c.l.b16 %v505
      %v538 = vunpack.c.l.b16 %v506
      %v539 = vunpack.c.l.b16 %v507
      %v540 = vunpack.c.l.b16 %v508
      %v541 = vunpack.c.l.b16 %v509
      %v542 = vunpack.c.l.b16 %v510
      %v543 = vunpack.c.l.b16 %v511
      %v544 = vunpack.c.l.b16 %v512
      %v545 = vunpack.c.l.b16 %v513
      %v546 = vunpack.c.l.b16 %v514
      %v547 = vunpack.c.l.b16 %v515
      %v548 = vunpack.c.l.b16 %v516
      %v549 = vpack.c.b16 %v534, %v533
      %v550 = vpack.c.b16 %v536, %v535
      %v551 = vpack.c.b16 %v538, %v537
      %v552 = vpack.c.b16 %v540, %v539
      %v553 = vpack.c.b16 %v542, %v541
      %v554 = vpack.c.b16 %v544, %v543
      %v555 = vpack.c.b16 %v546, %v545
      %v556 = vpack.c.b16 %v548, %v547
      %565 = vmatprep.subr.bf16.mxu0 0
      %566 = vmatpush1.bf16.msra.mxu0 %v549
      %567 = vmatprep.subr.bf16.mxu0 0
      %568 = vmatpush1.bf16.msra.mxu0 %v550
      %569 = vmatprep.subr.bf16.mxu0 0
      %570 = vmatpush1.bf16.msra.mxu0 %v551
      %571 = vmatprep.subr.bf16.mxu0 0
      %572 = vmatpush1.bf16.msra.mxu0 %v552
      %573 = vmatprep.subr.bf16.mxu0 0
      %574 = vmatpush1.bf16.msra.mxu0 %v553
      %575 = vmatprep.subr.bf16.mxu0 0
      %576 = vmatpush1.bf16.msra.mxu0 %v554
      %577 = vmatprep.subr.bf16.mxu0 0
      %578 = vmatpush1.bf16.msra.mxu0 %v555
      %579 = vmatprep.subr.bf16.mxu0 0
      %580 = vmatpush1.bf16.msra.mxu0 %v556
      %581 = vmatprep.subr.bf16.mxu0 0
      %582 = vmatpush1.bf16.msra.mxu0 0
      %583 = vmatprep.subr.bf16.mxu0 0
      %584 = vmatpush1.bf16.msra.mxu0 0
      %585 = vmatprep.subr.bf16.mxu0 0
      %586 = vmatpush1.bf16.msra.mxu0 0
      %587 = vmatprep.subr.bf16.mxu0 0
      %588 = vmatpush1.bf16.msra.mxu0 0
      %589 = vmatprep.subr.bf16.mxu0 0
      %590 = vmatpush1.bf16.msra.mxu0 0
      %591 = vmatprep.subr.bf16.mxu0 0
      %592 = vmatpush1.bf16.msra.mxu0 0
      %593 = vmatprep.subr.bf16.mxu0 0
      %594 = vmatpush1.bf16.msra.mxu0 0
      %595 = vmatprep.subr.bf16.mxu0 0
      %596 = vmatpush1.bf16.msra.mxu0 0
      %597 = vmatprep.mubr.bf16.mxu0 0
      %598 = vmatmul.mubr.bf16.gmra.mrb[0].mxu0 %v499
      %v599 = vpop.f32.mrb[0].mxu0
      %v600 = vadd.f32 0.0, %v599
      %v601 = vpop.f32.mrb[0].mxu0
      %v602 = vpop.f32.mrb[0].mxu0
      %v603 = vpop.f32.mrb[0].mxu0
      %604 = vdwg.mxu0
      %v605 = vadd.f32 %v493, %v600
      %606 = vst [vmem:[%s257] sm:$0xff] %v605
      %v607 = vrot.slane %v605, 4
      %v608 = vadd.f32 %v605, %v607
      %v609 = vrot.slane %v608, 2
      %v610 = vadd.f32 %v608, %v609
      %v611 = vrot.slane %v610, 1
      %v612 = vadd.f32 %v610, %v611
      %613 = vst [vmem:[%s260] sm:$0x1] %v612
      %v614 = vmul.f32 %v605, %v605
      %v615 = vrot.slane %v614, 4
      %v616 = vadd.f32 %v614, %v615
      %v617 = vrot.slane %v616, 2
      %v618 = vadd.f32 %v616, %v617
      %v619 = vrot.slane %v618, 1
      %v620 = vadd.f32 %v618, %v619
      %621 = vst [vmem:[%s263] sm:$0x1] %v620
      %p622 = scmp.lt.s32.totalorder %s18, 1
      %s623 = scalar_select %p622, %s18, 1
      %s624 = smul.addr %s623, 8
      %s625 = scalar_lea.vmem %s4, %s624
      %p626 = scmp.lt.s32.totalorder %s18, 1
      %s627 = scalar_select %p626, %s18, 1
      %s628 = scalar_lea.vmem %s5, %s627
      %p629 = scmp.lt.s32.totalorder %s18, 1
      %s630 = scalar_select %p629, %s18, 1
      %s631 = scalar_lea.vmem %s6, %s630
      // Predicated region
      $region37: #{se_basic_block.4} parent=35 // pred_check
        %p632 = pneg %p125
      $region38: #{se_basic_block.4} parent=35 // pred_check_branch
        %634 = sbr.rel (%p632) target = $region40
      $region39: #{se_basic_block.4} parent=35 // pred_region
        _
      $region40: #{se_basic_block.4} parent=35 // pred_fallthru
        _
      // Predicated region
      $region41: #{se_basic_block.4} parent=35 // pred_check
        %p635 = pneg %p151
      $region42: #{se_basic_block.4} parent=35 // pred_check_branch
        %637 = sbr.rel (%p635) target = $region44
      $region43: #{se_basic_block.4} parent=35 // pred_region
        _
      $region44: #{se_basic_block.4} parent=35 // pred_fallthru
        _
      // Predicated region
      $region45: #{se_basic_block.4} parent=35 // pred_check
        %p638 = pneg %p177
      $region46: #{se_basic_block.4} parent=35 // pred_check_branch
        %640 = sbr.rel (%p638) target = $region48
      $region47: #{se_basic_block.4} parent=35 // pred_region
        _
      $region48: #{se_basic_block.4} parent=35 // pred_fallthru
        _
    $region36: #{se_basic_block.4} parent=5 // pred_fallthru
      _
    %p641 = scmp.le.s32.totalorder 2, %s13
    // Predicated region
    $region49: #{se_basic_block.4} parent=5 // pred_check
      %p642 = pneg %p641
    $region50: #{se_basic_block.4} parent=5 // pred_check_branch
      %644 = sbr.rel (%p642) target = $region52
    $region51: #{se_basic_block.4} parent=5 // pred_region
      %s645 = ssub.s32 %s13, 2
      // Predicated region
      $region53: #{se_basic_block.4} parent=51 // pred_check
        %p646 = pneg %p131
      $region54: #{se_basic_block.4} parent=51 // pred_check_branch
        %648 = sbr.rel (%p646) target = $region56
      $region55: #{se_basic_block.4} parent=51 // pred_region
        %p649 = scmp.lt.s32.totalorder %s19, 1
        %s650 = scalar_select %p649, %s19, 1
        %s651 = smul.addr %s650, 8
        %s652 = scalar_lea.vmem %s4, %s651
      $region56: #{se_basic_block.4} parent=51 // pred_fallthru
        _
      // Predicated region
      $region57: #{se_basic_block.4} parent=51 // pred_check
        %p653 = pneg %p157
      $region58: #{se_basic_block.4} parent=51 // pred_check_branch
        %655 = sbr.rel (%p653) target = $region60
      $region59: #{se_basic_block.4} parent=51 // pred_region
        %p656 = scmp.lt.s32.totalorder %s19, 1
        %s657 = scalar_select %p656, %s19, 1
        %s658 = scalar_lea.vmem %s5, %s657
      $region60: #{se_basic_block.4} parent=51 // pred_fallthru
        _
      // Predicated region
      $region61: #{se_basic_block.4} parent=51 // pred_check
        %p659 = pneg %p183
      $region62: #{se_basic_block.4} parent=51 // pred_check_branch
        %661 = sbr.rel (%p659) target = $region64
      $region63: #{se_basic_block.4} parent=51 // pred_region
        %p662 = scmp.lt.s32.totalorder %s19, 1
        %s663 = scalar_select %p662, %s19, 1
        %s664 = scalar_lea.vmem %s6, %s663
      $region64: #{se_basic_block.4} parent=51 // pred_fallthru
        _
    $region52: #{se_basic_block.4} parent=5 // pred_fallthru
      _
  $region6: #{se_basic_block.4} parent=0 // loop_footer
    %s17 = sadd.s32 1, %s13
  $region7: #{se_basic_block.4} parent=0 // loop_footer_branch
    %12 = sbr.rel target = $region3
  $region8: #{se_basic_block.4} parent=0 // loop_exit
    _

// kernel: se_basic_block.5
$region0: #{se_basic_block.5}
  #allocation0 [shape = 'u32[]', space=smem, size = 0x4, offset = 0x4, fixed_abs, tag = 'smem constant byte address 0x4 - core index']
  #allocation1 [shape = 'u32[144,128]{1,0:T(1,128)}', space=vmem, size = 0x12000, scoped, tag = 'internal scratch']
  %s0 = inlined_call_operand.vmem [shape: f32[2,8,128], index: 0, kind: input, shape index: {}]
  %s1 = inlined_call_operand.vmem [shape: f32[2,8,128], index: 1, kind: input, shape index: {}]
  %s2 = inlined_call_operand.vmem [shape: f32[2,1,16], index: 2, kind: input, shape index: {}]
  %s3 = inlined_call_operand.vmem [shape: f32[1,128], index: 3, kind: input, shape index: {}]
  %s4 = inlined_call_operand.vmem [shape: f32[1,128], index: 4, kind: input, shape index: {}]
  %s5 = inlined_call_operand.vmem [shape: f32[1,16], index: 5, kind: input, shape index: {}]
  %s6 = inlined_call_operand.vmem [shape: f32[1,16], index: 6, kind: input, shape index: {}]
  %s7 = inlined_call_operand.vmem [shape: f32[16,2], index: 7, kind: input, shape index: {}]
  %s8 = inlined_call_operand.vmem [shape: f32[1,2], index: 8, kind: input, shape index: {}]
  %s9 = inlined_call_operand.vmem [shape: f32[2,128], index: 9, kind: input, shape index: {}]
  %s10 = inlined_call_operand.vmem [shape: f32[1,128], index: 10, kind: input, shape index: {}]
  %s11 = inlined_call_operand.vmem [shape: f32[2,8,128], index: 11, kind: output, shape index: {}]
  %s12 = sld [smem:[#allocation0]]
  $region77: #{se_basic_block.5} parent=0
    _
  %s14 = ssub.s32 1, %s12
  %s15 = scalar_select 0, %s14, %s12
  loop: start=0, step=1, limit=4
  $region2: #{se_basic_block.5} parent=0 // loop_pre_header
    _
  $region3: #{se_basic_block.5} parent=0 // loop_header
    %s17 = sphi 0, %s21
    %p18 = scmp.ge.s32.totalorder %s17, 4
    %s27 = sphi 0, %s29
    %s30 = sphi 0, %s27
    %s31 = sphi 0, %s30
    %s47 = sphi 0, %s31
    %s53 = sphi 0, %s55
    %s56 = sphi 0, %s53
    %s57 = sphi 0, %s56
    %s73 = sphi 0, %s57
    %s79 = sphi 0, %s81
    %s82 = sphi 0, %s79
    %s83 = sphi 0, %s82
    %s99 = sphi 0, %s83
    %s103 = sphi 0, %s103
    %s105 = sphi 0, %s103
    %s106 = sphi 0, %s105
    %s120 = sphi 0, %s106
    %s124 = sphi 0, %s124
    %s126 = sphi 0, %s124
    %s127 = sphi 0, %s126
    %s141 = sphi 0, %s127
    %s145 = sphi 0, %s145
    %s147 = sphi 0, %s145
    %s148 = sphi 0, %s147
    %s162 = sphi 0, %s148
    %s166 = sphi 0, %s166
    %s168 = sphi 0, %s166
    %s169 = sphi 0, %s168
    %s183 = sphi 0, %s169
    %s187 = sphi 0, %s187
    %s189 = sphi 0, %s187
    %s190 = sphi 0, %s189
    %s204 = sphi 0, %s190
    %s208 = sphi 0, %s208
    %s210 = sphi 0, %s208
    %s211 = sphi 0, %s210
    %s225 = sphi 0, %s211
    %s229 = sphi 0, %s229
    %s231 = sphi 0, %s229
    %s232 = sphi 0, %s231
    %s246 = sphi 0, %s232
    %s250 = sphi 0, %s250
    %s252 = sphi 0, %s250
    %s253 = sphi 0, %s252
    %s267 = sphi 0, %s253
    %s273 = sphi 0, %s275
    %s276 = sphi 0, %s273
    %s277 = sphi 0, %s276
    %s293 = sphi 0, %s277
  $region4: #{se_basic_block.5} parent=0 // loop_header_branch
    %20 = sbr.rel (%p18) target = $region8
  $region5: #{se_basic_block.5} parent=0 // loop_body
    %s22 = ssub.s32 %s17, 1
    %s23 = ssub.s32 %s17, 2
    %s24 = sadd.s32 %s17, 1
    %s25 = ssub.s32 %s17, %s24
    %p26 = scmp.eq.s32.totalorder %s25, 0
    %s28 = sadd.s32 %s27, 1
    %s29 = scalar_select %p26, %s27, %s28
    %p32 = pneg %p26
    %p33 = scmp.eq.s32.totalorder %s17, 1
    %p34 = por %p32, %p33
    %p35 = scmp.ne.s32.totalorder %s27, %s30
    %p36 = scmp.eq.s32.totalorder %s17, 0
    %p37 = por %p35, %p36
    %p38 = scmp.ne.s32.totalorder %s27, %s30
    %p39 = scmp.eq.s32.totalorder %s22, 1
    %p40 = por %p38, %p39
    %p41 = scmp.ne.s32.totalorder %s30, %s31
    %p42 = scmp.eq.s32.totalorder %s22, 0
    %p43 = por %p41, %p42
    %p44 = scmp.ne.s32.totalorder %s30, %s31
    %p45 = scmp.eq.s32.totalorder %s23, 1
    %p46 = por %p44, %p45
    %p48 = scmp.ne.s32.totalorder %s31, %s47
    %p49 = scmp.eq.s32.totalorder %s23, 0
    %p50 = por %p48, %p49
    %s51 = ssub.s32 %s17, %s24
    %p52 = scmp.eq.s32.totalorder %s51, 0
    %s54 = sadd.s32 %s53, 1
    %s55 = scalar_select %p52, %s53, %s54
    %p58 = pneg %p52
    %p59 = scmp.eq.s32.totalorder %s17, 1
    %p60 = por %p58, %p59
    %p61 = scmp.ne.s32.totalorder %s53, %s56
    %p62 = scmp.eq.s32.totalorder %s17, 0
    %p63 = por %p61, %p62
    %p64 = scmp.ne.s32.totalorder %s53, %s56
    %p65 = scmp.eq.s32.totalorder %s22, 1
    %p66 = por %p64, %p65
    %p67 = scmp.ne.s32.totalorder %s56, %s57
    %p68 = scmp.eq.s32.totalorder %s22, 0
    %p69 = por %p67, %p68
    %p70 = scmp.ne.s32.totalorder %s56, %s57
    %p71 = scmp.eq.s32.totalorder %s23, 1
    %p72 = por %p70, %p71
    %p74 = scmp.ne.s32.totalorder %s57, %s73
    %p75 = scmp.eq.s32.totalorder %s23, 0
    %p76 = por %p74, %p75
    %s77 = ssub.s32 %s17, %s24
    %p78 = scmp.eq.s32.totalorder %s77, 0
    %s80 = sadd.s32 %s79, 1
    %s81 = scalar_select %p78, %s79, %s80
    %p84 = pneg %p78
    %p85 = scmp.eq.s32.totalorder %s17, 1
    %p86 = por %p84, %p85
    %p87 = scmp.ne.s32.totalorder %s79, %s82
    %p88 = scmp.eq.s32.totalorder %s17, 0
    %p89 = por %p87, %p88
    %p90 = scmp.ne.s32.totalorder %s79, %s82
    %p91 = scmp.eq.s32.totalorder %s22, 1
    %p92 = por %p90, %p91
    %p93 = scmp.ne.s32.totalorder %s82, %s83
    %p94 = scmp.eq.s32.totalorder %s22, 0
    %p95 = por %p93, %p94
    %p96 = scmp.ne.s32.totalorder %s82, %s83
    %p97 = scmp.eq.s32.totalorder %s23, 1
    %p98 = por %p96, %p97
    %p100 = scmp.ne.s32.totalorder %s83, %s99
    %p101 = scmp.eq.s32.totalorder %s23, 0
    %p102 = por %p100, %p101
    %s104 = sadd.s32 %s103, 1
    %p107 = scmp.eq.s32.totalorder %s17, 1
    %p108 = scmp.ne.s32.totalorder %s103, %s105
    %p109 = scmp.eq.s32.totalorder %s17, 0
    %p110 = por %p108, %p109
    %p111 = scmp.ne.s32.totalorder %s103, %s105
    %p112 = scmp.eq.s32.totalorder %s22, 1
    %p113 = por %p111, %p112
    %p114 = scmp.ne.s32.totalorder %s105, %s106
    %p115 = scmp.eq.s32.totalorder %s22, 0
    %p116 = por %p114, %p115
    %p117 = scmp.ne.s32.totalorder %s105, %s106
    %p118 = scmp.eq.s32.totalorder %s23, 1
    %p119 = por %p117, %p118
    %p121 = scmp.ne.s32.totalorder %s106, %s120
    %p122 = scmp.eq.s32.totalorder %s23, 0
    %p123 = por %p121, %p122
    %s125 = sadd.s32 %s124, 1
    %p128 = scmp.eq.s32.totalorder %s17, 1
    %p129 = scmp.ne.s32.totalorder %s124, %s126
    %p130 = scmp.eq.s32.totalorder %s17, 0
    %p131 = por %p129, %p130
    %p132 = scmp.ne.s32.totalorder %s124, %s126
    %p133 = scmp.eq.s32.totalorder %s22, 1
    %p134 = por %p132, %p133
    %p135 = scmp.ne.s32.totalorder %s126, %s127
    %p136 = scmp.eq.s32.totalorder %s22, 0
    %p137 = por %p135, %p136
    %p138 = scmp.ne.s32.totalorder %s126, %s127
    %p139 = scmp.eq.s32.totalorder %s23, 1
    %p140 = por %p138, %p139
    %p142 = scmp.ne.s32.totalorder %s127, %s141
    %p143 = scmp.eq.s32.totalorder %s23, 0
    %p144 = por %p142, %p143
    %s146 = sadd.s32 %s145, 1
    %p149 = scmp.eq.s32.totalorder %s17, 1
    %p150 = scmp.ne.s32.totalorder %s145, %s147
    %p151 = scmp.eq.s32.totalorder %s17, 0
    %p152 = por %p150, %p151
    %p153 = scmp.ne.s32.totalorder %s145, %s147
    %p154 = scmp.eq.s32.totalorder %s22, 1
    %p155 = por %p153, %p154
    %p156 = scmp.ne.s32.totalorder %s147, %s148
    %p157 = scmp.eq.s32.totalorder %s22, 0
    %p158 = por %p156, %p157
    %p159 = scmp.ne.s32.totalorder %s147, %s148
    %p160 = scmp.eq.s32.totalorder %s23, 1
    %p161 = por %p159, %p160
    %p163 = scmp.ne.s32.totalorder %s148, %s162
    %p164 = scmp.eq.s32.totalorder %s23, 0
    %p165 = por %p163, %p164
    %s167 = sadd.s32 %s166, 1
    %p170 = scmp.eq.s32.totalorder %s17, 1
    %p171 = scmp.ne.s32.totalorder %s166, %s168
    %p172 = scmp.eq.s32.totalorder %s17, 0
    %p173 = por %p171, %p172
    %p174 = scmp.ne.s32.totalorder %s166, %s168
    %p175 = scmp.eq.s32.totalorder %s22, 1
    %p176 = por %p174, %p175
    %p177 = scmp.ne.s32.totalorder %s168, %s169
    %p178 = scmp.eq.s32.totalorder %s22, 0
    %p179 = por %p177, %p178
    %p180 = scmp.ne.s32.totalorder %s168, %s169
    %p181 = scmp.eq.s32.totalorder %s23, 1
    %p182 = por %p180, %p181
    %p184 = scmp.ne.s32.totalorder %s169, %s183
    %p185 = scmp.eq.s32.totalorder %s23, 0
    %p186 = por %p184, %p185
    %s188 = sadd.s32 %s187, 1
    %p191 = scmp.eq.s32.totalorder %s17, 1
    %p192 = scmp.ne.s32.totalorder %s187, %s189
    %p193 = scmp.eq.s32.totalorder %s17, 0
    %p194 = por %p192, %p193
    %p195 = scmp.ne.s32.totalorder %s187, %s189
    %p196 = scmp.eq.s32.totalorder %s22, 1
    %p197 = por %p195, %p196
    %p198 = scmp.ne.s32.totalorder %s189, %s190
    %p199 = scmp.eq.s32.totalorder %s22, 0
    %p200 = por %p198, %p199
    %p201 = scmp.ne.s32.totalorder %s189, %s190
    %p202 = scmp.eq.s32.totalorder %s23, 1
    %p203 = por %p201, %p202
    %p205 = scmp.ne.s32.totalorder %s190, %s204
    %p206 = scmp.eq.s32.totalorder %s23, 0
    %p207 = por %p205, %p206
    %s209 = sadd.s32 %s208, 1
    %p212 = scmp.eq.s32.totalorder %s17, 1
    %p213 = scmp.ne.s32.totalorder %s208, %s210
    %p214 = scmp.eq.s32.totalorder %s17, 0
    %p215 = por %p213, %p214
    %p216 = scmp.ne.s32.totalorder %s208, %s210
    %p217 = scmp.eq.s32.totalorder %s22, 1
    %p218 = por %p216, %p217
    %p219 = scmp.ne.s32.totalorder %s210, %s211
    %p220 = scmp.eq.s32.totalorder %s22, 0
    %p221 = por %p219, %p220
    %p222 = scmp.ne.s32.totalorder %s210, %s211
    %p223 = scmp.eq.s32.totalorder %s23, 1
    %p224 = por %p222, %p223
    %p226 = scmp.ne.s32.totalorder %s211, %s225
    %p227 = scmp.eq.s32.totalorder %s23, 0
    %p228 = por %p226, %p227
    %s230 = sadd.s32 %s229, 1
    %p233 = scmp.eq.s32.totalorder %s17, 1
    %p234 = scmp.ne.s32.totalorder %s229, %s231
    %p235 = scmp.eq.s32.totalorder %s17, 0
    %p236 = por %p234, %p235
    %p237 = scmp.ne.s32.totalorder %s229, %s231
    %p238 = scmp.eq.s32.totalorder %s22, 1
    %p239 = por %p237, %p238
    %p240 = scmp.ne.s32.totalorder %s231, %s232
    %p241 = scmp.eq.s32.totalorder %s22, 0
    %p242 = por %p240, %p241
    %p243 = scmp.ne.s32.totalorder %s231, %s232
    %p244 = scmp.eq.s32.totalorder %s23, 1
    %p245 = por %p243, %p244
    %p247 = scmp.ne.s32.totalorder %s232, %s246
    %p248 = scmp.eq.s32.totalorder %s23, 0
    %p249 = por %p247, %p248
    %s251 = sadd.s32 %s250, 1
    %p254 = scmp.eq.s32.totalorder %s17, 1
    %p255 = scmp.ne.s32.totalorder %s250, %s252
    %p256 = scmp.eq.s32.totalorder %s17, 0
    %p257 = por %p255, %p256
    %p258 = scmp.ne.s32.totalorder %s250, %s252
    %p259 = scmp.eq.s32.totalorder %s22, 1
    %p260 = por %p258, %p259
    %p261 = scmp.ne.s32.totalorder %s252, %s253
    %p262 = scmp.eq.s32.totalorder %s22, 0
    %p263 = por %p261, %p262
    %p264 = scmp.ne.s32.totalorder %s252, %s253
    %p265 = scmp.eq.s32.totalorder %s23, 1
    %p266 = por %p264, %p265
    %p268 = scmp.ne.s32.totalorder %s253, %s267
    %p269 = scmp.eq.s32.totalorder %s23, 0
    %p270 = por %p268, %p269
    %s271 = ssub.s32 %s17, %s24
    %p272 = scmp.eq.s32.totalorder %s271, 0
    %s274 = sadd.s32 %s273, 1
    %s275 = scalar_select %p272, %s273, %s274
    %p278 = pneg %p272
    %p279 = scmp.eq.s32.totalorder %s17, 1
    %p280 = por %p278, %p279
    %p281 = scmp.ne.s32.totalorder %s273, %s276
    %p282 = scmp.eq.s32.totalorder %s17, 0
    %p283 = por %p281, %p282
    %p284 = scmp.ne.s32.totalorder %s273, %s276
    %p285 = scmp.eq.s32.totalorder %s22, 1
    %p286 = por %p284, %p285
    %p287 = scmp.ne.s32.totalorder %s276, %s277
    %p288 = scmp.eq.s32.totalorder %s22, 0
    %p289 = por %p287, %p288
    %p290 = scmp.ne.s32.totalorder %s276, %s277
    %p291 = scmp.eq.s32.totalorder %s23, 1
    %p292 = por %p290, %p291
    %p294 = scmp.ne.s32.totalorder %s277, %s293
    %p295 = scmp.eq.s32.totalorder %s23, 0
    %p296 = por %p294, %p295
    %p297 = scmp.le.s32.totalorder 1, %s17
    %p298 = scmp.lt.s32.totalorder %s17, 3
    %p299 = pnand %p297, %p298
    %p300 = pneg %p299
    // Predicated region
    $region9: #{se_basic_block.5} parent=5 // pred_check
      _
    $region10: #{se_basic_block.5} parent=5 // pred_check_branch
      %302 = sbr.rel (%p299) target = $region12
    $region11: #{se_basic_block.5} parent=5 // pred_region
      %s303 = ssub.s32 %s17, 1
      // Predicated region
      $region13: #{se_basic_block.5} parent=11 // pred_check
        %p304 = pneg %p116
      $region14: #{se_basic_block.5} parent=11 // pred_check_branch
        %306 = sbr.rel (%p304) target = $region16
      $region15: #{se_basic_block.5} parent=11 // pred_region
        _
      $region16: #{se_basic_block.5} parent=11 // pred_fallthru
        _
      // Predicated region
      $region17: #{se_basic_block.5} parent=11 // pred_check
        %p307 = pneg %p137
      $region18: #{se_basic_block.5} parent=11 // pred_check_branch
        %309 = sbr.rel (%p307) target = $region20
      $region19: #{se_basic_block.5} parent=11 // pred_region
        _
      $region20: #{se_basic_block.5} parent=11 // pred_fallthru
        _
      // Predicated region
      $region21: #{se_basic_block.5} parent=11 // pred_check
        %p310 = pneg %p158
      $region22: #{se_basic_block.5} parent=11 // pred_check_branch
        %312 = sbr.rel (%p310) target = $region24
      $region23: #{se_basic_block.5} parent=11 // pred_region
        _
      $region24: #{se_basic_block.5} parent=11 // pred_fallthru
        _
      // Predicated region
      $region25: #{se_basic_block.5} parent=11 // pred_check
        %p313 = pneg %p179
      $region26: #{se_basic_block.5} parent=11 // pred_check_branch
        %315 = sbr.rel (%p313) target = $region28
      $region27: #{se_basic_block.5} parent=11 // pred_region
        _
      $region28: #{se_basic_block.5} parent=11 // pred_fallthru
        _
      // Predicated region
      $region29: #{se_basic_block.5} parent=11 // pred_check
        %p316 = pneg %p200
      $region30: #{se_basic_block.5} parent=11 // pred_check_branch
        %318 = sbr.rel (%p316) target = $region32
      $region31: #{se_basic_block.5} parent=11 // pred_region
        _
      $region32: #{se_basic_block.5} parent=11 // pred_fallthru
        _
      // Predicated region
      $region33: #{se_basic_block.5} parent=11 // pred_check
        %p319 = pneg %p221
      $region34: #{se_basic_block.5} parent=11 // pred_check_branch
        %321 = sbr.rel (%p319) target = $region36
      $region35: #{se_basic_block.5} parent=11 // pred_region
        _
      $region36: #{se_basic_block.5} parent=11 // pred_fallthru
        _
      // Predicated region
      $region37: #{se_basic_block.5} parent=11 // pred_check
        %p322 = pneg %p242
      $region38: #{se_basic_block.5} parent=11 // pred_check_branch
        %324 = sbr.rel (%p322) target = $region40
      $region39: #{se_basic_block.5} parent=11 // pred_region
        _
      $region40: #{se_basic_block.5} parent=11 // pred_fallthru
        _
      // Predicated region
      $region41: #{se_basic_block.5} parent=11 // pred_check
        %p325 = pneg %p263
      $region42: #{se_basic_block.5} parent=11 // pred_check_branch
        %327 = sbr.rel (%p325) target = $region44
      $region43: #{se_basic_block.5} parent=11 // pred_region
        _
      $region44: #{se_basic_block.5} parent=11 // pred_fallthru
        _
    $region12: #{se_basic_block.5} parent=5 // pred_fallthru
      _
    %p328 = scmp.lt.s32.totalorder %s17, 2
    // Predicated region
    $region45: #{se_basic_block.5} parent=5 // pred_check
      %p329 = pneg %p328
    $region46: #{se_basic_block.5} parent=5 // pred_check_branch
      %331 = sbr.rel (%p329) target = $region48
    $region47: #{se_basic_block.5} parent=5 // pred_region
      // Predicated region
      $region49: #{se_basic_block.5} parent=47 // pred_check
        %p332 = pneg %p37
      $region50: #{se_basic_block.5} parent=47 // pred_check_branch
        %334 = sbr.rel (%p332) target = $region52
      $region51: #{se_basic_block.5} parent=47 // pred_region
        %p335 = scmp.lt.s32.totalorder %s17, 1
        %s336 = scalar_select %p335, %s17, 1
        %s337 = smul.addr %s336, 8
        %s338 = scalar_lea.vmem %s0, %s337
      $region52: #{se_basic_block.5} parent=47 // pred_fallthru
        _
      // Predicated region
      $region53: #{se_basic_block.5} parent=47 // pred_check
        %p339 = pneg %p63
      $region54: #{se_basic_block.5} parent=47 // pred_check_branch
        %341 = sbr.rel (%p339) target = $region56
      $region55: #{se_basic_block.5} parent=47 // pred_region
        %p342 = scmp.lt.s32.totalorder %s17, 1
        %s343 = scalar_select %p342, %s17, 1
        %s344 = smul.addr %s343, 8
        %s345 = scalar_lea.vmem %s1, %s344
      $region56: #{se_basic_block.5} parent=47 // pred_fallthru
        _
      // Predicated region
      $region57: #{se_basic_block.5} parent=47 // pred_check
        %p346 = pneg %p89
      $region58: #{se_basic_block.5} parent=47 // pred_check_branch
        %348 = sbr.rel (%p346) target = $region60
      $region59: #{se_basic_block.5} parent=47 // pred_region
        %p349 = scmp.lt.s32.totalorder %s17, 1
        %s350 = scalar_select %p349, %s17, 1
        %s351 = scalar_lea.vmem %s2, %s350
      $region60: #{se_basic_block.5} parent=47 // pred_fallthru
        _
    $region48: #{se_basic_block.5} parent=5 // pred_fallthru
      _
    %p352 = scmp.le.s32.totalorder 1, %s17
    %p353 = scmp.lt.s32.totalorder %s17, 3
    %p354 = pnand %p352, %p353
    %p355 = pneg %p354
    // Predicated region
    $region61: #{se_basic_block.5} parent=5 // pred_check
      _
    $region62: #{se_basic_block.5} parent=5 // pred_check_branch
      %357 = sbr.rel (%p354) target = $region64
    $region63: #{se_basic_block.5} parent=5 // pred_region
      %s358 = ssub.s32 %s17, 1
      %p359 = scmp.lt.s32.totalorder %s22, 1
      %s360 = scalar_select %p359, %s22, 1
      %s361 = smul.addr %s360, 8
      %s362 = scalar_lea.vmem %s0, %s361
      %p363 = pneg %p43
      %p364 = pneg %p40
      %p365 = scmp.lt.s32.totalorder %s22, 1
      %s366 = scalar_select %p365, %s22, 1
      %s367 = smul.addr %s366, 8
      %s368 = scalar_lea.vmem %s1, %s367
      %p369 = pneg %p69
      %p370 = pneg %p66
      %p371 = scmp.lt.s32.totalorder %s22, 1
      %s372 = scalar_select %p371, %s22, 1
      %s373 = scalar_lea.vmem %s2, %s372
      %p374 = pneg %p95
      %p375 = pneg %p92
      %p376 = pneg %p116
      %p377 = pneg %p113
      %p378 = pneg %p137
      %p379 = pneg %p134
      %p380 = pneg %p158
      %p381 = pneg %p155
      %p382 = pneg %p179
      %p383 = pneg %p176
      %p384 = pneg %p200
      %p385 = pneg %p197
      %p386 = pneg %p221
      %p387 = pneg %p218
      %p388 = pneg %p242
      %p389 = pneg %p239
      %p390 = pneg %p263
      %p391 = pneg %p260
      %p392 = pneg %p289
      %p393 = pneg %p286
      %p394 = scmp.lt.s32.totalorder %s22, 1
      %s395 = scalar_select %p394, %s22, 1
      %s396 = smul.addr %s395, 8
      %s397 = scalar_lea.vmem %s11, %s396
      %p398 = scmp.lt.s32.totalorder %s22, 1
      %s399 = scalar_select %p398, %s22, 1
      %s400 = smul.addr %s399, 8
      %s401 = scalar_lea.vmem %s0, %s400
      %p402 = scmp.lt.s32.totalorder %s22, 1
      %s403 = scalar_select %p402, %s22, 1
      %s404 = smul.addr %s403, 8
      %s405 = scalar_lea.vmem %s1, %s404
      %p406 = scmp.lt.s32.totalorder %s22, 1
      %s407 = scalar_select %p406, %s22, 1
      %s408 = scalar_lea.vmem %s2, %s407
      %p409 = scmp.lt.s32.totalorder %s22, 1
      %s410 = scalar_select %p409, %s22, 1
      %s411 = smul.addr %s410, 8
      %s412 = scalar_lea.vmem %s11, %s411
      %v413 = vld [vmem:[%s408] sm:$0x1]
      %v414 = vld [vmem:[%s5] sm:$0x1]
      %v415 = vmul.f32 %v413, %v414
      %v416 = vld [vmem:[%s6] sm:$0x1]
      %v417 = vadd.f32 %v415, %v416
      %v418 = vld [vmem:[%s7] sm:$0xff]
      %v419 = vld [vmem:[%s7 + $0x8] sm:$0xff]
      %v420 = vld [vmem:[%s8] sm:$0x1]
      %vm421 = vcmask 130048
      %v423 = vsel %vm421, %v417, 0
      %425 = vmatprep.subr.mxu0 0.0
      %426 = vmatpush1.msra.mxu0 %v418
      %427 = vmatprep.subr.mxu0 0.0
      %428 = vmatpush1.msra.mxu0 %v419
      %429 = vmatprep.subr.mxu0 0.0
      %430 = vmatpush1.msra.mxu0 0.0
      %431 = vmatprep.subr.mxu0 0.0
      %432 = vmatpush1.msra.mxu0 0.0
      %433 = vmatprep.subr.mxu0 0.0
      %434 = vmatpush1.msra.mxu0 0.0
      %435 = vmatprep.subr.mxu0 0.0
      %436 = vmatpush1.msra.mxu0 0.0
      %437 = vmatprep.subr.mxu0 0.0
      %438 = vmatpush1.msra.mxu0 0.0
      %439 = vmatprep.subr.mxu0 0.0
      %440 = vmatpush1.msra.mxu0 0.0
      %441 = vmatprep.subr.mxu0 0.0
      %442 = vmatpush1.msra.mxu0 0.0
      %443 = vmatprep.subr.mxu0 0.0
      %444 = vmatpush1.msra.mxu0 0.0
      %445 = vmatprep.subr.mxu0 0.0
      %446 = vmatpush1.msra.mxu0 0.0
      %447 = vmatprep.subr.mxu0 0.0
      %448 = vmatpush1.msra.mxu0 0.0
      %449 = vmatprep.subr.mxu0 0.0
      %450 = vmatpush1.msra.mxu0 0.0
      %451 = vmatprep.subr.mxu0 0.0
      %452 = vmatpush1.msra.mxu0 0.0
      %453 = vmatprep.subr.mxu0 0.0
      %454 = vmatpush1.msra.mxu0 0.0
      %455 = vmatprep.subr.mxu0 0.0
      %456 = vmatpush1.msra.mxu0 0.0
      %457 = vmatprep.subr.mxu0 0.0
      %458 = vmatpush1.msra.mxu0 0.0
      %459 = vmatprep.subr.mxu0 0.0
      %460 = vmatpush1.msra.mxu0 0.0
      %461 = vmatprep.subr.mxu0 0.0
      %462 = vmatpush1.msra.mxu0 0.0
      %463 = vmatprep.subr.mxu0 0.0
      %464 = vmatpush1.msra.mxu0 0.0
      %465 = vmatprep.subr.mxu0 0.0
      %466 = vmatpush1.msra.mxu0 0.0
      %467 = vmatprep.subr.mxu0 0.0
      %468 = vmatpush1.msra.mxu0 0.0
      %469 = vmatprep.subr.mxu0 0.0
      %470 = vmatpush1.msra.mxu0 0.0
      %471 = vmatprep.subr.mxu0 0.0
      %472 = vmatpush1.msra.mxu0 0.0
      %473 = vmatprep.subr.mxu0 0.0
      %474 = vmatpush1.msra.mxu0 0.0
      %475 = vmatprep.subr.mxu0 0.0
      %476 = vmatpush1.msra.mxu0 0.0
      %477 = vmatprep.subr.mxu0 0.0
      %478 = vmatpush1.msra.mxu0 0.0
      %479 = vmatprep.subr.mxu0 0.0
      %480 = vmatpush1.msra.mxu0 0.0
      %481 = vmatprep.subr.mxu0 0.0
      %482 = vmatpush1.msra.mxu0 0.0
      %483 = vmatprep.subr.mxu0 0.0
      %484 = vmatpush1.msra.mxu0 0.0
      %485 = vmatprep.subr.mxu0 0.0
      %486 = vmatpush1.msra.mxu0 0.0
      %487 = vmatprep.subr.mxu0 0.0
      %488 = vmatpush1.msra.mxu0 0.0
      %489 = vmatprep.mubr.f32.mxu0 0.0
      %490 = vmatmul.mubr.f32.gmra.mrb[0].mxu0 %v423
      %v491 = vpop.f32.mrb[0].mxu0
      %v492 = vadd.f32 %v420, %v491
      %v493 = vpop.f32.mrb[0].mxu0
      %494 = vdwg.mxu0
      %v495 = vmax.f32 %v492, 0.0
      %v496 = vld [vmem:[%s9] sm:$0x3]
      %v497 = vld [vmem:[%s10] sm:$0x1]
      %vm498 = vcmask 15360
      %v500 = vsel %vm498, %v495, 0
      %vm502 = vcmask 1041408
      %v504 = vsel %vm502, %v496, 0
      %506 = vmatprep.subr.mxu0 0.0
      %507 = vmatpush1.msra.mxu0 %v504
      %508 = vmatprep.subr.mxu0 0.0
      %509 = vmatpush1.msra.mxu0 0.0
      %510 = vmatprep.subr.mxu0 0.0
      %511 = vmatpush1.msra.mxu0 0.0
      %512 = vmatprep.subr.mxu0 0.0
      %513 = vmatpush1.msra.mxu0 0.0
      %514 = vmatprep.subr.mxu0 0.0
      %515 = vmatpush1.msra.mxu0 0.0
      %516 = vmatprep.subr.mxu0 0.0
      %517 = vmatpush1.msra.mxu0 0.0
      %518 = vmatprep.subr.mxu0 0.0
      %519 = vmatpush1.msra.mxu0 0.0
      %520 = vmatprep.subr.mxu0 0.0
      %521 = vmatpush1.msra.mxu0 0.0
      %522 = vmatprep.subr.mxu0 0.0
      %523 = vmatpush1.msra.mxu0 0.0
      %524 = vmatprep.subr.mxu0 0.0
      %525 = vmatpush1.msra.mxu0 0.0
      %526 = vmatprep.subr.mxu0 0.0
      %527 = vmatpush1.msra.mxu0 0.0
      %528 = vmatprep.subr.mxu0 0.0
      %529 = vmatpush1.msra.mxu0 0.0
      %530 = vmatprep.subr.mxu0 0.0
      %531 = vmatpush1.msra.mxu0 0.0
      %532 = vmatprep.subr.mxu0 0.0
      %533 = vmatpush1.msra.mxu0 0.0
      %534 = vmatprep.subr.mxu0 0.0
      %535 = vmatpush1.msra.mxu0 0.0
      %536 = vmatprep.subr.mxu0 0.0
      %537 = vmatpush1.msra.mxu0 0.0
      %538 = vmatprep.subr.mxu0 0.0
      %539 = vmatpush1.msra.mxu0 0.0
      %540 = vmatprep.subr.mxu0 0.0
      %541 = vmatpush1.msra.mxu0 0.0
      %542 = vmatprep.subr.mxu0 0.0
      %543 = vmatpush1.msra.mxu0 0.0
      %544 = vmatprep.subr.mxu0 0.0
      %545 = vmatpush1.msra.mxu0 0.0
      %546 = vmatprep.subr.mxu0 0.0
      %547 = vmatpush1.msra.mxu0 0.0
      %548 = vmatprep.subr.mxu0 0.0
      %549 = vmatpush1.msra.mxu0 0.0
      %550 = vmatprep.subr.mxu0 0.0
      %551 = vmatpush1.msra.mxu0 0.0
      %552 = vmatprep.subr.mxu0 0.0
      %553 = vmatpush1.msra.mxu0 0.0
      %554 = vmatprep.subr.mxu0 0.0
      %555 = vmatpush1.msra.mxu0 0.0
      %556 = vmatprep.subr.mxu0 0.0
      %557 = vmatpush1.msra.mxu0 0.0
      %558 = vmatprep.subr.mxu0 0.0
      %559 = vmatpush1.msra.mxu0 0.0
      %560 = vmatprep.subr.mxu0 0.0
      %561 = vmatpush1.msra.mxu0 0.0
      %562 = vmatprep.subr.mxu0 0.0
      %563 = vmatpush1.msra.mxu0 0.0
      %564 = vmatprep.subr.mxu0 0.0
      %565 = vmatpush1.msra.mxu0 0.0
      %566 = vmatprep.subr.mxu0 0.0
      %567 = vmatpush1.msra.mxu0 0.0
      %568 = vmatprep.subr.mxu0 0.0
      %569 = vmatpush1.msra.mxu0 0.0
      %570 = vmatprep.mubr.f32.mxu0 0.0
      %571 = vmatmul.mubr.f32.gmra.mrb[0].mxu0 %v500
      %v572 = vpop.f32.mrb[0].mxu0
      %v573 = vadd.f32 %v497, %v572
      %v574 = vpop.f32.mrb[0].mxu0
      %575 = vdwg.mxu0
      %v576 = vxor.u32 %v573, 2147483648
      %v577 = vmul.f32 %v576, 1.442695
      %v578 = vpow.pop %v577
      %v579 = vadd.f32 %v578, 1.0
      %v580 = vrcp.pop %v579
      %v581 = vmul.f32 1.0, %v580
      %v582 = vld [vmem:[%s401] sm:$0xff]
      %v583 = vld [vmem:[%s3] sm:$0x1]
      %v585 = vlaneseq
      %v586 = vshrl.u32 %v585, 7
      %v587 = vsub.s32 0, %v586
      %v588 = vrot.slane %v583, %v587
      %v590 = vmul.f32 %v582, %v588
      %v591 = vld [vmem:[%s4] sm:$0x1]
      %v593 = vlaneseq
      %v594 = vshrl.u32 %v593, 7
      %v595 = vsub.s32 0, %v594
      %v596 = vrot.slane %v591, %v595
      %v598 = vadd.f32 %v590, %v596
      %v599 = vlaneseq
      %v600 = vshrl.u32 %v599, 7
      %v601 = vsub.s32 0, %v600
      %v602 = vrot.slane %v581, %v601
      %v603 = vmul.f32 %v598, %v602
      %v604 = vld [vmem:[%s405] sm:$0xff]
      %v605 = vadd.f32 %v603, %v604
      %v606 = vmax.f32 %v605, 0.0
      %607 = vst [vmem:[%s412] sm:$0xff] %v606
      %p608 = scmp.lt.s32.totalorder %s22, 1
      %s609 = scalar_select %p608, %s22, 1
      %s610 = smul.addr %s609, 8
      %s611 = scalar_lea.vmem %s11, %s610
      // Predicated region
      $region65: #{se_basic_block.5} parent=63 // pred_check
        %p612 = pneg %p286
      $region66: #{se_basic_block.5} parent=63 // pred_check_branch
        %614 = sbr.rel (%p612) target = $region68
      $region67: #{se_basic_block.5} parent=63 // pred_region
        _
      $region68: #{se_basic_block.5} parent=63 // pred_fallthru
        _
    $region64: #{se_basic_block.5} parent=5 // pred_fallthru
      _
    %p615 = scmp.le.s32.totalorder 2, %s17
    // Predicated region
    $region69: #{se_basic_block.5} parent=5 // pred_check
      %p616 = pneg %p615
    $region70: #{se_basic_block.5} parent=5 // pred_check_branch
      %618 = sbr.rel (%p616) target = $region72
    $region71: #{se_basic_block.5} parent=5 // pred_region
      %s619 = ssub.s32 %s17, 2
      // Predicated region
      $region73: #{se_basic_block.5} parent=71 // pred_check
        %p620 = pneg %p292
      $region74: #{se_basic_block.5} parent=71 // pred_check_branch
        %622 = sbr.rel (%p620) target = $region76
      $region75: #{se_basic_block.5} parent=71 // pred_region
        %p623 = scmp.lt.s32.totalorder %s23, 1
        %s624 = scalar_select %p623, %s23, 1
        %s625 = smul.addr %s624, 8
        %s626 = scalar_lea.vmem %s11, %s625
      $region76: #{se_basic_block.5} parent=71 // pred_fallthru
        _
    $region72: #{se_basic_block.5} parent=5 // pred_fallthru
      _
  $region6: #{se_basic_block.5} parent=0 // loop_footer
    %s21 = sadd.s32 1, %s17
  $region7: #{se_basic_block.5} parent=0 // loop_footer_branch
    %16 = sbr.rel target = $region3
  $region8: #{se_basic_block.5} parent=0 // loop_exit
    _

</llo_original>
